<compile_context>
chip_gen: v6e
topology: v6e:2x2x1
jax: 0.10.0
libtpu: 0.0.40
codegen_flags: <defaults>
</compile_context>

<pallas_src>
import math

import jax
import jax.numpy as jnp
from jax.experimental import pallas as pl
from jax.experimental.pallas import tpu as pltpu

_PH = jax.lax.Precision.HIGHEST


# ----------------------------------------------------------------------------
# Pure-JAX reference ops (used ONLY for init-time weight packing + the
# correctness cross-check in __main__; the forward itself runs in Pallas).
# ----------------------------------------------------------------------------
def _conv3x3_s2_p1(x, w):
    """PyTorch Conv2d(k=3, s=2, p=1), no bias. x:(N,Cin,H,W) w:(Cout,Cin,3,3)."""
    _, _, H, W = x.shape
    Ho, Wo = H // 2, W // 2
    xp = jnp.pad(x, ((0, 0), (0, 0), (1, 1), (1, 1)))
    out = 0.0
    for ky in range(3):
        for kx in range(3):
            patch = xp[:, :, ky:ky + 2 * Ho:2, kx:kx + 2 * Wo:2]   # (N,Cin,Ho,Wo)
            out = out + jnp.einsum("bchw,oc->bohw", patch, w[:, :, ky, kx],
                                   precision=_PH)
    return out


def _convT_k2_s2(x, w):
    """PyTorch ConvTranspose2d(k=2, s=2), no bias. x:(N,Ci,H,W) w:(Ci,Co,2,2)."""
    B, _, H, W = x.shape
    Co = w.shape[1]
    t = jnp.einsum("bchw,cokl->bohkwl", x, w, precision=_PH)       # (B,Co,H,2,W,2)
    return t.reshape(B, Co, 2 * H, 2 * W)


def _convT_k2_s1_1x1(x, w):
    """PyTorch ConvTranspose2d(k=2, s=1) on 1x1 input. x:(N,Ci,1,1) w:(Ci,Co,2,2)."""
    z = x.reshape(x.shape[0], -1)
    return jnp.einsum("bc,cokl->bokl", z, w, precision=_PH)        # (B,Co,2,2)


# ----------------------------------------------------------------------------
# Init-time weight packing: lower every conv to a dense matmul matrix.
# ----------------------------------------------------------------------------
def _dense_from_linear_op(op, in_shape):
    """Return W (Din, Dout) with flatten(op(x)) == flatten(x) @ W (row-major)."""
    din = math.prod(in_shape)
    basis = jnp.eye(din, dtype=jnp.float32).reshape((din,) + tuple(in_shape))
    out = op(basis)                                                # (Din, *out_shape)
    return out.reshape(din, -1).astype(jnp.float32)


def _flat_bias(b, out_shape):
    """Broadcast per-channel bias over (C,H,W) and flatten row-major -> (1, C*H*W)."""
    return jnp.broadcast_to(b[:, None, None], out_shape).reshape(1, -1).astype(jnp.float32)


PACKED_ORDER = ("w1", "b1", "w2", "b2", "w3", "b3",
                "wfc12", "bfc12", "wfc3", "bfc3",
                "wd1", "bd1", "wd2", "bd2", "wd3", "bd3")


def pack_params(raw):
    """One-time packing of PyTorch-shaped params into matmul-ready matrices.

    Weight matrices -> bf16 (MXU inputs, halves weight DMA); biases stay f32.
    """
    w, b = {}, {}
    # encoder convs -> dense (Din, Dout) maps over row-major NCHW flattening
    w["w1"] = _dense_from_linear_op(lambda v: _conv3x3_s2_p1(v, raw["ec1_w"]), (1, 16, 16))
    b["b1"] = _flat_bias(raw["ec1_b"], (4, 8, 8))                  # (1, 256)
    w["w2"] = _dense_from_linear_op(lambda v: _conv3x3_s2_p1(v, raw["ec2_w"]), (4, 8, 8))
    b["b2"] = _flat_bias(raw["ec2_b"], (8, 4, 4))                  # (1, 128)
    w["w3"] = _dense_from_linear_op(lambda v: _conv3x3_s2_p1(v, raw["ec3_w"]), (8, 4, 4))
    b["b3"] = _flat_bias(raw["ec3_b"], (16, 2, 2))                 # (1, 64)

    # fc1/fc2 fused into one (64, 128) weight (zero-padded columns) so the
    # kernel emits a single lane-dense [mu | logvar | 0] slab.
    wfc12 = jnp.concatenate([raw["fc1_w"].T, raw["fc2_w"].T], axis=1)       # (64, 64)
    w["wfc12"] = jnp.pad(wfc12, ((0, 0), (0, 64)))                          # (64, 128)
    bfc12 = jnp.concatenate([raw["fc1_b"], raw["fc2_b"]])                   # (64,)
    b["bfc12"] = jnp.pad(bfc12, (0, 64)).reshape(1, -1).astype(jnp.float32)  # (1, 128)

    w["wfc3"] = raw["fc3_w"].T                                              # (32, 64)
    b["bfc3"] = raw["fc3_b"].reshape(1, -1).astype(jnp.float32)

    # decoder conv-transposes -> dense maps
    w["wd1"] = _dense_from_linear_op(lambda v: _convT_k2_s1_1x1(v, raw["dc1_w"]), (64, 1, 1))
    b["bd1"] = _flat_bias(raw["dc1_b"], (16, 2, 2))                # (1, 64)
    w["wd2"] = _dense_from_linear_op(lambda v: _convT_k2_s2(v, raw["dc2_w"]), (16, 2, 2))
    b["bd2"] = _flat_bias(raw["dc2_b"], (8, 4, 4))                 # (1, 128)
    w["wd3"] = _dense_from_linear_op(lambda v: _convT_k2_s2(v, raw["dc3_w"]), (8, 4, 4))
    b["bd3"] = _flat_bias(raw["dc3_b"], (4, 8, 8))                 # (1, 256)

    packed = {k: v.astype(jnp.bfloat16) for k, v in w.items()}
    packed.update({k: v.astype(jnp.float32) for k, v in b.items()})
    return packed


# ----------------------------------------------------------------------------
# The fused Pallas kernel: entire VAE forward, VMEM-resident, one batch tile
# of TM rows per grid step.
# ----------------------------------------------------------------------------
def _vae_fused_kernel(
        x_ref, eps_ref,
        w1, b1, w2, b2, w3, b3,
        wfc12, bfc12, wfc3, bfc3,
        wd1, bd1, wd2, bd2, wd3, bd3,
        recon_ref, mulv_ref):

    bf16 = jnp.bfloat16

    def mm(x, w_ref, b_ref):
        # bf16 MXU matmul, f32 accumulation; (1, N) bias broadcast-added in f32.
        return jnp.dot(x.astype(bf16), w_ref[...],
                       preferred_element_type=jnp.float32) + b_ref[...]

    def relu(v):
        return jnp.maximum(v, 0.0)

    # ---- encoder (3 strided convs as dense matmuls) ----
    h = relu(mm(x_ref[...], w1, b1))          # (TM, 256)  == (4, 8, 8)
    h = relu(mm(h, w2, b2))                   # (TM, 128)  == (8, 4, 4)
    h = relu(mm(h, w3, b3))                   # (TM, 64)   == Flatten output

    # ---- bottleneck: fused fc1/fc2 -> lane-dense [mu | logvar | 0] slab ----
    t = mm(h, wfc12, bfc12)                   # (TM, 128)
    mulv_ref[...] = t                         # single unmasked full-slab store
    mu = t[:, :32]
    logvar = t[:, 32:64]
    z = mu + eps_ref[...] * jnp.exp(0.5 * logvar)

    # ---- decoder ----
    d = mm(z, wfc3, bfc3)                     # (TM, 64)
    d = relu(mm(d, wd1, bd1))                 # (TM, 64)   == (16, 2, 2)
    d = relu(mm(d, wd2, bd2))                 # (TM, 128)  == (8, 4, 4)
    logits = mm(d, wd3, bd3)                  # (TM, 256)  == (4, 8, 8) == (1, 16, 16)
    # sigmoid: exp on EUP + approx reciprocal on EUP, clipped to [0, 1]
    sig = pl.reciprocal(1.0 + jnp.exp(-logits), approx=True)
    recon_ref[...] = jnp.clip(sig, 0.0, 1.0)


def vae_forward(packed, x, eps, tm=128):
    """Full VAE forward. x: any shape with size % 256 == 0 (viewed as (B,1,16,16)).

    tm: batch-tile rows per grid step. 128 is MXU-width aligned on v5e and
    works everywhere; use 256 on v6e/v7x for full 256-wide MXU rows.
    """
    B = x.size // (1 * 16 * 16)
    x_flat = jnp.reshape(x, (B, 256)).astype(jnp.bfloat16)   # bf16 halves x DMA
    eps = jnp.reshape(eps, (B, 32)).astype(jnp.float32)

    # pad batch rows up to a multiple of the tile so every MXU pass is full
    Mp = ((B + tm - 1) // tm) * tm
    pad = Mp - B
    if pad:
        x_flat = jnp.pad(x_flat, ((0, pad), (0, 0)))
        eps = jnp.pad(eps, ((0, pad), (0, 0)))

    weights = [packed[k] for k in PACKED_ORDER]
    in_specs = (
        [pl.BlockSpec((tm, 256), lambda i: (i, 0)),          # x: row-tiled
         pl.BlockSpec((tm, 32), lambda i: (i, 0))]           # eps: row-tiled
        # weights/biases: constant index_map -> VMEM-resident across the grid
        + [pl.BlockSpec(wgt.shape, lambda i: (0, 0)) for wgt in weights]
    )
    out_shape = (
        jax.ShapeDtypeStruct((Mp, 256), jnp.float32),         # recon (lane-dense)
        jax.ShapeDtypeStruct((Mp, 128), jnp.float32),         # [mu | logvar | 0]
    )
    out_specs = (
        pl.BlockSpec((tm, 256), lambda i: (i, 0)),
        pl.BlockSpec((tm, 128), lambda i: (i, 0)),
    )

    recon_flat, mulv = pl.pallas_call(
        _vae_fused_kernel,
        grid=(Mp // tm,),
        out_shape=out_shape,
        in_specs=in_specs,
        out_specs=out_specs,
        compiler_params=pltpu.CompilerParams(
            dimension_semantics=("parallel",)),               # dual-TC on v7x
    )(x_flat, eps, *weights)

    recon = recon_flat[:B].reshape(B, 1, 16, 16)
    return recon, mulv[:B, :32], mulv[:B, 32:64]


# ----------------------------------------------------------------------------
# Parameter init (deterministic, PyTorch-shaped)
# ----------------------------------------------------------------------------
def init_params(key):
    def u(k, shape, fan_in):
        bound = 1.0 / jnp.sqrt(fan_in)
        return jax.random.uniform(k, shape, jnp.float32, -bound, bound)

    ks = jax.random.split(key, 20)
    p = {}
    # encoder: Conv2d(1,4,3,2,1), Conv2d(4,8,3,2,1), Conv2d(8,16,3,2,1)
    p["ec1_w"], p["ec1_b"] = u(ks[0], (4, 1, 3, 3), 1 * 9), u(ks[1], (4,), 1 * 9)
    p["ec2_w"], p["ec2_b"] = u(ks[2], (8, 4, 3, 3), 4 * 9), u(ks[3], (8,), 4 * 9)
    p["ec3_w"], p["ec3_b"] = u(ks[4], (16, 8, 3, 3), 8 * 9), u(ks[5], (16,), 8 * 9)
    # fc1/fc2: Linear(64,32); fc3: Linear(32,64)   (PyTorch weight = (out,in))
    p["fc1_w"], p["fc1_b"] = u(ks[6], (32, 64), 64), u(ks[7], (32,), 64)
    p["fc2_w"], p["fc2_b"] = u(ks[8], (32, 64), 64), u(ks[9], (32,), 64)
    p["fc3_w"], p["fc3_b"] = u(ks[10], (64, 32), 32), u(ks[11], (64,), 32)
    # decoder: ConvT(64,16,2,1), ConvT(16,8,2,2), ConvT(8,4,2,2)
    #   (PyTorch ConvTranspose2d weight = (Cin, Cout, kH, kW))
    p["dc1_w"], p["dc1_b"] = u(ks[12], (64, 16, 2, 2), 64 * 4), u(ks[13], (16,), 64 * 4)
    p["dc2_w"], p["dc2_b"] = u(ks[14], (16, 8, 2, 2), 16 * 4), u(ks[15], (8,), 16 * 4)
    p["dc3_w"], p["dc3_b"] = u(ks[16], (8, 4, 2, 2), 8 * 4), u(ks[17], (4,), 8 * 4)
    return p


# ----------------------------------------------------------------------------
# Plain-JAX reference (mirrors the PyTorch module) for correctness checking.
# ----------------------------------------------------------------------------
def reference_forward(raw, x, eps):
    B = x.size // 256
    x = x.reshape(B, 1, 16, 16).astype(jnp.float32)
    h = jax.nn.relu(_conv3x3_s2_p1(x, raw["ec1_w"]) + raw["ec1_b"][None, :, None, None])
    h = jax.nn.relu(_conv3x3_s2_p1(h, raw["ec2_w"]) + raw["ec2_b"][None, :, None, None])
    h = jax.nn.relu(_conv3x3_s2_p1(h, raw["ec3_w"]) + raw["ec3_b"][None, :, None, None])
    h = h.reshape(B, 64)
    mu = jnp.dot(h, raw["fc1_w"].T, precision=_PH) + raw["fc1_b"]
    logvar = jnp.dot(h, raw["fc2_w"].T, precision=_PH) + raw["fc2_b"]
    z = mu + eps * jnp.exp(0.5 * logvar)
    d = jnp.dot(z, raw["fc3_w"].T, precision=_PH) + raw["fc3_b"]
    d = d.reshape(B, 64, 1, 1)
    d = jax.nn.relu(_convT_k2_s1_1x1(d, raw["dc1_w"]) + raw["dc1_b"][None, :, None, None])
    d = jax.nn.relu(_convT_k2_s2(d, raw["dc2_w"]) + raw["dc2_b"][None, :, None, None])
    d = jax.nn.sigmoid(_convT_k2_s2(d, raw["dc3_w"]) + raw["dc3_b"][None, :, None, None])
    return d.reshape(B, 1, 16, 16), mu, logvar


# ----------------------------------------------------------------------------
if __name__ == "__main__":
    key = jax.random.PRNGKey(0)
    k_param, k_x, k_eps = jax.random.split(key, 3)

    B = 2
    x = jax.random.normal(k_x, (B, 1, 16, 16), jnp.float32)
    # deterministic "randn_like" noise for the reparameterization trick
    eps = jax.random.normal(k_eps, (B, 32), jnp.float32)

    raw_params = init_params(k_param)
    packed_params = pack_params(raw_params)   # one-time, init-side packing

    fwd = jax.jit(vae_forward)
    recon, mu, logvar = fwd(packed_params, x, eps)
    jax.block_until_ready((recon, mu, logvar))

    assert recon.shape == (B, 1, 16, 16)
    assert mu.shape == (B, 32) and logvar.shape == (B, 32)
    assert bool(jnp.all(jnp.isfinite(recon)))
    assert bool(jnp.all((recon >= 0.0) & (recon <= 1.0)))   # sigmoid range

    # cross-check against the plain-JAX reference of the PyTorch module
    # (bf16 weights inside the kernel -> loose-but-meaningful tolerance)
    r_recon, r_mu, r_logvar = reference_forward(raw_params, x, eps)
    assert bool(jnp.allclose(mu, r_mu, atol=3e-2, rtol=3e-2))
    assert bool(jnp.allclose(logvar, r_logvar, atol=3e-2, rtol=3e-2))
    assert bool(jnp.allclose(recon, r_recon, atol=3e-2, rtol=3e-2))

    print("KERNEL_OK")
</pallas_src>

<mosaic_0001>
module attributes {stable_mosaic.version = 11 : i64} {
  func.func @_vae_fused_kernel(%arg0: i32, %arg1: memref<128x256xbf16, #tpu.memory_space<vmem>>, %arg2: memref<128x32xf32, #tpu.memory_space<vmem>>, %arg3: memref<256x256xbf16, #tpu.memory_space<vmem>>, %arg4: memref<1x256xf32, #tpu.memory_space<vmem>>, %arg5: memref<256x128xbf16, #tpu.memory_space<vmem>>, %arg6: memref<1x128xf32, #tpu.memory_space<vmem>>, %arg7: memref<128x64xbf16, #tpu.memory_space<vmem>>, %arg8: memref<1x64xf32, #tpu.memory_space<vmem>>, %arg9: memref<64x128xbf16, #tpu.memory_space<vmem>>, %arg10: memref<1x128xf32, #tpu.memory_space<vmem>>, %arg11: memref<32x64xbf16, #tpu.memory_space<vmem>>, %arg12: memref<1x64xf32, #tpu.memory_space<vmem>>, %arg13: memref<64x64xbf16, #tpu.memory_space<vmem>>, %arg14: memref<1x64xf32, #tpu.memory_space<vmem>>, %arg15: memref<64x128xbf16, #tpu.memory_space<vmem>>, %arg16: memref<1x128xf32, #tpu.memory_space<vmem>>, %arg17: memref<128x256xbf16, #tpu.memory_space<vmem>>, %arg18: memref<1x256xf32, #tpu.memory_space<vmem>>, %arg19: memref<128x256xf32, #tpu.memory_space<vmem>>, %arg20: memref<128x128xf32, #tpu.memory_space<vmem>>) attributes {dimension_semantics = [#tpu.dimension_semantics<parallel>], iteration_bounds = array<i64: 1>, scalar_prefetch = 0 : i64, scratch_operands = 0 : i64, tpu.core_type = #tpu.core_type<tc>, window_params = [{transform_indices = @transform_0, window_bounds = array<i64: 128, 256>}, {transform_indices = @transform_1, window_bounds = array<i64: 128, 32>}, {pipeline_mode = #tpu.pipeline_mode<synchronous>, transform_indices = @transform_2, window_bounds = array<i64: 256, 256>}, {pipeline_mode = #tpu.pipeline_mode<synchronous>, transform_indices = @transform_3, window_bounds = array<i64: 1, 256>}, {pipeline_mode = #tpu.pipeline_mode<synchronous>, transform_indices = @transform_4, window_bounds = array<i64: 256, 128>}, {pipeline_mode = #tpu.pipeline_mode<synchronous>, transform_indices = @transform_5, window_bounds = array<i64: 1, 128>}, {pipeline_mode = #tpu.pipeline_mode<synchronous>, transform_indices = @transform_6, window_bounds = array<i64: 128, 64>}, {pipeline_mode = #tpu.pipeline_mode<synchronous>, transform_indices = @transform_7, window_bounds = array<i64: 1, 64>}, {pipeline_mode = #tpu.pipeline_mode<synchronous>, transform_indices = @transform_8, window_bounds = array<i64: 64, 128>}, {pipeline_mode = #tpu.pipeline_mode<synchronous>, transform_indices = @transform_9, window_bounds = array<i64: 1, 128>}, {pipeline_mode = #tpu.pipeline_mode<synchronous>, transform_indices = @transform_10, window_bounds = array<i64: 32, 64>}, {pipeline_mode = #tpu.pipeline_mode<synchronous>, transform_indices = @transform_11, window_bounds = array<i64: 1, 64>}, {pipeline_mode = #tpu.pipeline_mode<synchronous>, transform_indices = @transform_12, window_bounds = array<i64: 64, 64>}, {pipeline_mode = #tpu.pipeline_mode<synchronous>, transform_indices = @transform_13, window_bounds = array<i64: 1, 64>}, {pipeline_mode = #tpu.pipeline_mode<synchronous>, transform_indices = @transform_14, window_bounds = array<i64: 64, 128>}, {pipeline_mode = #tpu.pipeline_mode<synchronous>, transform_indices = @transform_15, window_bounds = array<i64: 1, 128>}, {pipeline_mode = #tpu.pipeline_mode<synchronous>, transform_indices = @transform_16, window_bounds = array<i64: 128, 256>}, {pipeline_mode = #tpu.pipeline_mode<synchronous>, transform_indices = @transform_17, window_bounds = array<i64: 1, 256>}, {transform_indices = @transform_18, window_bounds = array<i64: 128, 256>}, {transform_indices = @transform_19, window_bounds = array<i64: 128, 128>}]} {
    %c0 = arith.constant 0 : index
    %c0_0 = arith.constant 0 : index
    %0 = vector.load %arg1[%c0, %c0_0] : memref<128x256xbf16, #tpu.memory_space<vmem>>, vector<128x256xbf16>
    %c0_1 = arith.constant 0 : index
    %c0_2 = arith.constant 0 : index
    %1 = vector.load %arg3[%c0_1, %c0_2] : memref<256x256xbf16, #tpu.memory_space<vmem>>, vector<256x256xbf16>
    %cst = arith.constant dense<0.000000e+00> : vector<128x256xf32>
    %2 = tpu.matmul %0, %1, %cst {dimension_numbers = #tpu.dot_dimension_numbers<[1], [0], [0], [1], [0, 0, 1, 1], [], []>} : vector<128x256xbf16>, vector<256x256xbf16>, vector<128x256xf32> -> vector<128x256xf32>
    %c0_3 = arith.constant 0 : index
    %c0_4 = arith.constant 0 : index
    %3 = vector.load %arg4[%c0_3, %c0_4] : memref<1x256xf32, #tpu.memory_space<vmem>>, vector<1x256xf32>
    %4 = vector.broadcast %3 : vector<1x256xf32> to vector<128x256xf32>
    %5 = arith.addf %2, %4 : vector<128x256xf32>
    %cst_5 = arith.constant 0.000000e+00 : f32
    %6 = vector.broadcast %cst_5 : f32 to vector<128x256xf32>
    %7 = arith.maximumf %5, %6 : vector<128x256xf32>
    %8 = arith.truncf %7 : vector<128x256xf32> to vector<128x256xbf16>
    %c0_6 = arith.constant 0 : index
    %c0_7 = arith.constant 0 : index
    %9 = vector.load %arg5[%c0_6, %c0_7] : memref<256x128xbf16, #tpu.memory_space<vmem>>, vector<256x128xbf16>
    %cst_8 = arith.constant dense<0.000000e+00> : vector<128x128xf32>
    %10 = tpu.matmul %8, %9, %cst_8 {dimension_numbers = #tpu.dot_dimension_numbers<[1], [0], [0], [1], [0, 0, 1, 1], [], []>} : vector<128x256xbf16>, vector<256x128xbf16>, vector<128x128xf32> -> vector<128x128xf32>
    %c0_9 = arith.constant 0 : index
    %c0_10 = arith.constant 0 : index
    %11 = vector.load %arg6[%c0_9, %c0_10] : memref<1x128xf32, #tpu.memory_space<vmem>>, vector<1x128xf32>
    %12 = vector.broadcast %11 : vector<1x128xf32> to vector<128x128xf32>
    %13 = arith.addf %10, %12 : vector<128x128xf32>
    %cst_11 = arith.constant 0.000000e+00 : f32
    %14 = vector.broadcast %cst_11 : f32 to vector<128x128xf32>
    %15 = arith.maximumf %13, %14 : vector<128x128xf32>
    %16 = arith.truncf %15 : vector<128x128xf32> to vector<128x128xbf16>
    %c0_12 = arith.constant 0 : index
    %c0_13 = arith.constant 0 : index
    %17 = vector.load %arg7[%c0_12, %c0_13] : memref<128x64xbf16, #tpu.memory_space<vmem>>, vector<128x64xbf16>
    %cst_14 = arith.constant dense<0.000000e+00> : vector<128x64xf32>
    %18 = tpu.matmul %16, %17, %cst_14 {dimension_numbers = #tpu.dot_dimension_numbers<[1], [0], [0], [1], [0, 0, 1, 1], [], []>} : vector<128x128xbf16>, vector<128x64xbf16>, vector<128x64xf32> -> vector<128x64xf32>
    %c0_15 = arith.constant 0 : index
    %c0_16 = arith.constant 0 : index
    %19 = vector.load %arg8[%c0_15, %c0_16] : memref<1x64xf32, #tpu.memory_space<vmem>>, vector<1x64xf32>
    %20 = vector.broadcast %19 : vector<1x64xf32> to vector<128x64xf32>
    %21 = arith.addf %18, %20 : vector<128x64xf32>
    %cst_17 = arith.constant 0.000000e+00 : f32
    %22 = vector.broadcast %cst_17 : f32 to vector<128x64xf32>
    %23 = arith.maximumf %21, %22 : vector<128x64xf32>
    %24 = arith.truncf %23 : vector<128x64xf32> to vector<128x64xbf16>
    %c0_18 = arith.constant 0 : index
    %c0_19 = arith.constant 0 : index
    %25 = vector.load %arg9[%c0_18, %c0_19] : memref<64x128xbf16, #tpu.memory_space<vmem>>, vector<64x128xbf16>
    %cst_20 = arith.constant dense<0.000000e+00> : vector<128x128xf32>
    %26 = tpu.matmul %24, %25, %cst_20 {dimension_numbers = #tpu.dot_dimension_numbers<[1], [0], [0], [1], [0, 0, 1, 1], [], []>} : vector<128x64xbf16>, vector<64x128xbf16>, vector<128x128xf32> -> vector<128x128xf32>
    %c0_21 = arith.constant 0 : index
    %c0_22 = arith.constant 0 : index
    %27 = vector.load %arg10[%c0_21, %c0_22] : memref<1x128xf32, #tpu.memory_space<vmem>>, vector<1x128xf32>
    %28 = vector.broadcast %27 : vector<1x128xf32> to vector<128x128xf32>
    %29 = arith.addf %26, %28 : vector<128x128xf32>
    %c0_23 = arith.constant 0 : index
    %c0_24 = arith.constant 0 : index
    %30 = vector.load %arg20[%c0_23, %c0_24] : memref<128x128xf32, #tpu.memory_space<vmem>>, vector<128x128xf32>
    tpu.vector_store %arg20[%c0_23, %c0_24], %29 {strides = array<i32>} : memref<128x128xf32, #tpu.memory_space<vmem>>, vector<128x128xf32>,
    %31 = vector.extract_strided_slice %29 {offsets = [0, 0], sizes = [128, 32], strides = [1, 1]} : vector<128x128xf32> to vector<128x32xf32>
    %32 = vector.extract_strided_slice %29 {offsets = [0, 32], sizes = [128, 32], strides = [1, 1]} : vector<128x128xf32> to vector<128x32xf32>
    %c0_25 = arith.constant 0 : index
    %c0_26 = arith.constant 0 : index
    %33 = vector.load %arg2[%c0_25, %c0_26] : memref<128x32xf32, #tpu.memory_space<vmem>>, vector<128x32xf32>
    %cst_27 = arith.constant 5.000000e-01 : f32
    %34 = vector.broadcast %cst_27 : f32 to vector<128x32xf32>
    %35 = arith.mulf %34, %32 : vector<128x32xf32>
    %36 = math.exp %35 : vector<128x32xf32>
    %37 = arith.mulf %33, %36 : vector<128x32xf32>
    %38 = arith.addf %31, %37 : vector<128x32xf32>
    %39 = arith.truncf %38 : vector<128x32xf32> to vector<128x32xbf16>
    %c0_28 = arith.constant 0 : index
    %c0_29 = arith.constant 0 : index
    %40 = vector.load %arg11[%c0_28, %c0_29] : memref<32x64xbf16, #tpu.memory_space<vmem>>, vector<32x64xbf16>
    %cst_30 = arith.constant dense<0.000000e+00> : vector<128x64xf32>
    %41 = tpu.matmul %39, %40, %cst_30 {dimension_numbers = #tpu.dot_dimension_numbers<[1], [0], [0], [1], [0, 0, 1, 1], [], []>} : vector<128x32xbf16>, vector<32x64xbf16>, vector<128x64xf32> -> vector<128x64xf32>
    %c0_31 = arith.constant 0 : index
    %c0_32 = arith.constant 0 : index
    %42 = vector.load %arg12[%c0_31, %c0_32] : memref<1x64xf32, #tpu.memory_space<vmem>>, vector<1x64xf32>
    %43 = vector.broadcast %42 : vector<1x64xf32> to vector<128x64xf32>
    %44 = arith.addf %41, %43 : vector<128x64xf32>
    %45 = arith.truncf %44 : vector<128x64xf32> to vector<128x64xbf16>
    %c0_33 = arith.constant 0 : index
    %c0_34 = arith.constant 0 : index
    %46 = vector.load %arg13[%c0_33, %c0_34] : memref<64x64xbf16, #tpu.memory_space<vmem>>, vector<64x64xbf16>
    %cst_35 = arith.constant dense<0.000000e+00> : vector<128x64xf32>
    %47 = tpu.matmul %45, %46, %cst_35 {dimension_numbers = #tpu.dot_dimension_numbers<[1], [0], [0], [1], [0, 0, 1, 1], [], []>} : vector<128x64xbf16>, vector<64x64xbf16>, vector<128x64xf32> -> vector<128x64xf32>
    %c0_36 = arith.constant 0 : index
    %c0_37 = arith.constant 0 : index
    %48 = vector.load %arg14[%c0_36, %c0_37] : memref<1x64xf32, #tpu.memory_space<vmem>>, vector<1x64xf32>
    %49 = vector.broadcast %48 : vector<1x64xf32> to vector<128x64xf32>
    %50 = arith.addf %47, %49 : vector<128x64xf32>
    %cst_38 = arith.constant 0.000000e+00 : f32
    %51 = vector.broadcast %cst_38 : f32 to vector<128x64xf32>
    %52 = arith.maximumf %50, %51 : vector<128x64xf32>
    %53 = arith.truncf %52 : vector<128x64xf32> to vector<128x64xbf16>
    %c0_39 = arith.constant 0 : index
    %c0_40 = arith.constant 0 : index
    %54 = vector.load %arg15[%c0_39, %c0_40] : memref<64x128xbf16, #tpu.memory_space<vmem>>, vector<64x128xbf16>
    %cst_41 = arith.constant dense<0.000000e+00> : vector<128x128xf32>
    %55 = tpu.matmul %53, %54, %cst_41 {dimension_numbers = #tpu.dot_dimension_numbers<[1], [0], [0], [1], [0, 0, 1, 1], [], []>} : vector<128x64xbf16>, vector<64x128xbf16>, vector<128x128xf32> -> vector<128x128xf32>
    %c0_42 = arith.constant 0 : index
    %c0_43 = arith.constant 0 : index
    %56 = vector.load %arg16[%c0_42, %c0_43] : memref<1x128xf32, #tpu.memory_space<vmem>>, vector<1x128xf32>
    %57 = vector.broadcast %56 : vector<1x128xf32> to vector<128x128xf32>
    %58 = arith.addf %55, %57 : vector<128x128xf32>
    %cst_44 = arith.constant 0.000000e+00 : f32
    %59 = vector.broadcast %cst_44 : f32 to vector<128x128xf32>
    %60 = arith.maximumf %58, %59 : vector<128x128xf32>
    %61 = arith.truncf %60 : vector<128x128xf32> to vector<128x128xbf16>
    %c0_45 = arith.constant 0 : index
    %c0_46 = arith.constant 0 : index
    %62 = vector.load %arg17[%c0_45, %c0_46] : memref<128x256xbf16, #tpu.memory_space<vmem>>, vector<128x256xbf16>
    %cst_47 = arith.constant dense<0.000000e+00> : vector<128x256xf32>
    %63 = tpu.matmul %61, %62, %cst_47 {dimension_numbers = #tpu.dot_dimension_numbers<[1], [0], [0], [1], [0, 0, 1, 1], [], []>} : vector<128x128xbf16>, vector<128x256xbf16>, vector<128x256xf32> -> vector<128x256xf32>
    %c0_48 = arith.constant 0 : index
    %c0_49 = arith.constant 0 : index
    %64 = vector.load %arg18[%c0_48, %c0_49] : memref<1x256xf32, #tpu.memory_space<vmem>>, vector<1x256xf32>
    %65 = vector.broadcast %64 : vector<1x256xf32> to vector<128x256xf32>
    %66 = arith.addf %63, %65 : vector<128x256xf32>
    %cst_50 = arith.constant 0.000000e+00 : f32
    %67 = vector.broadcast %cst_50 : f32 to vector<128x256xf32>
    %68 = arith.subf %67, %66 : vector<128x256xf32>
    %69 = math.exp %68 : vector<128x256xf32>
    %cst_51 = arith.constant 1.000000e+00 : f32
    %70 = vector.broadcast %cst_51 : f32 to vector<128x256xf32>
    %71 = arith.addf %70, %69 : vector<128x256xf32>
    %72 = tpu.reciprocal %71 {approx = true} : vector<128x256xf32> -> vector<128x256xf32>
    %cst_52 = arith.constant 0.000000e+00 : f32
    %cst_53 = arith.constant 1.000000e+00 : f32
    %73 = vector.broadcast %cst_52 : f32 to vector<128x256xf32>
    %74 = arith.maximumf %73, %72 : vector<128x256xf32>
    %75 = vector.broadcast %cst_53 : f32 to vector<128x256xf32>
    %76 = arith.minimumf %75, %74 : vector<128x256xf32>
    %c0_54 = arith.constant 0 : index
    %c0_55 = arith.constant 0 : index
    %77 = vector.load %arg19[%c0_54, %c0_55] : memref<128x256xf32, #tpu.memory_space<vmem>>, vector<128x256xf32>
    tpu.vector_store %arg19[%c0_54, %c0_55], %76 {strides = array<i32>} : memref<128x256xf32, #tpu.memory_space<vmem>>, vector<128x256xf32>,
    return
  }
  func.func @transform_0(%arg0: i32) -> (i32, i32) {
    %c0_i32 = arith.constant 0 : i32
    %c0_i32_0 = arith.constant 0 : i32
    return %arg0, %c0_i32 : i32, i32
  }
  func.func @transform_1(%arg0: i32) -> (i32, i32) {
    %c0_i32 = arith.constant 0 : i32
    %c0_i32_0 = arith.constant 0 : i32
    return %arg0, %c0_i32 : i32, i32
  }
  func.func @transform_2(%arg0: i32) -> (i32, i32) {
    %c0_i32 = arith.constant 0 : i32
    %c0_i32_0 = arith.constant 0 : i32
    %c0_i32_1 = arith.constant 0 : i32
    return %c0_i32, %c0_i32_0 : i32, i32
  }
  func.func @transform_3(%arg0: i32) -> (i32, i32) {
    %c0_i32 = arith.constant 0 : i32
    %c0_i32_0 = arith.constant 0 : i32
    %c0_i32_1 = arith.constant 0 : i32
    return %c0_i32, %c0_i32_0 : i32, i32
  }
  func.func @transform_4(%arg0: i32) -> (i32, i32) {
    %c0_i32 = arith.constant 0 : i32
    %c0_i32_0 = arith.constant 0 : i32
    %c0_i32_1 = arith.constant 0 : i32
    return %c0_i32, %c0_i32_0 : i32, i32
  }
  func.func @transform_5(%arg0: i32) -> (i32, i32) {
    %c0_i32 = arith.constant 0 : i32
    %c0_i32_0 = arith.constant 0 : i32
    %c0_i32_1 = arith.constant 0 : i32
    return %c0_i32, %c0_i32_0 : i32, i32
  }
  func.func @transform_6(%arg0: i32) -> (i32, i32) {
    %c0_i32 = arith.constant 0 : i32
    %c0_i32_0 = arith.constant 0 : i32
    %c0_i32_1 = arith.constant 0 : i32
    return %c0_i32, %c0_i32_0 : i32, i32
  }
  func.func @transform_7(%arg0: i32) -> (i32, i32) {
    %c0_i32 = arith.constant 0 : i32
    %c0_i32_0 = arith.constant 0 : i32
    %c0_i32_1 = arith.constant 0 : i32
    return %c0_i32, %c0_i32_0 : i32, i32
  }
  func.func @transform_8(%arg0: i32) -> (i32, i32) {
    %c0_i32 = arith.constant 0 : i32
    %c0_i32_0 = arith.constant 0 : i32
    %c0_i32_1 = arith.constant 0 : i32
    return %c0_i32, %c0_i32_0 : i32, i32
  }
  func.func @transform_9(%arg0: i32) -> (i32, i32) {
    %c0_i32 = arith.constant 0 : i32
    %c0_i32_0 = arith.constant 0 : i32
    %c0_i32_1 = arith.constant 0 : i32
    return %c0_i32, %c0_i32_0 : i32, i32
  }
  func.func @transform_10(%arg0: i32) -> (i32, i32) {
    %c0_i32 = arith.constant 0 : i32
    %c0_i32_0 = arith.constant 0 : i32
    %c0_i32_1 = arith.constant 0 : i32
    return %c0_i32, %c0_i32_0 : i32, i32
  }
  func.func @transform_11(%arg0: i32) -> (i32, i32) {
    %c0_i32 = arith.constant 0 : i32
    %c0_i32_0 = arith.constant 0 : i32
    %c0_i32_1 = arith.constant 0 : i32
    return %c0_i32, %c0_i32_0 : i32, i32
  }
  func.func @transform_12(%arg0: i32) -> (i32, i32) {
    %c0_i32 = arith.constant 0 : i32
    %c0_i32_0 = arith.constant 0 : i32
    %c0_i32_1 = arith.constant 0 : i32
    return %c0_i32, %c0_i32_0 : i32, i32
  }
  func.func @transform_13(%arg0: i32) -> (i32, i32) {
    %c0_i32 = arith.constant 0 : i32
    %c0_i32_0 = arith.constant 0 : i32
    %c0_i32_1 = arith.constant 0 : i32
    return %c0_i32, %c0_i32_0 : i32, i32
  }
  func.func @transform_14(%arg0: i32) -> (i32, i32) {
    %c0_i32 = arith.constant 0 : i32
    %c0_i32_0 = arith.constant 0 : i32
    %c0_i32_1 = arith.constant 0 : i32
    return %c0_i32, %c0_i32_0 : i32, i32
  }
  func.func @transform_15(%arg0: i32) -> (i32, i32) {
    %c0_i32 = arith.constant 0 : i32
    %c0_i32_0 = arith.constant 0 : i32
    %c0_i32_1 = arith.constant 0 : i32
    return %c0_i32, %c0_i32_0 : i32, i32
  }
  func.func @transform_16(%arg0: i32) -> (i32, i32) {
    %c0_i32 = arith.constant 0 : i32
    %c0_i32_0 = arith.constant 0 : i32
    %c0_i32_1 = arith.constant 0 : i32
    return %c0_i32, %c0_i32_0 : i32, i32
  }
  func.func @transform_17(%arg0: i32) -> (i32, i32) {
    %c0_i32 = arith.constant 0 : i32
    %c0_i32_0 = arith.constant 0 : i32
    %c0_i32_1 = arith.constant 0 : i32
    return %c0_i32, %c0_i32_0 : i32, i32
  }
  func.func @transform_18(%arg0: i32) -> (i32, i32) {
    %c0_i32 = arith.constant 0 : i32
    %c0_i32_0 = arith.constant 0 : i32
    return %arg0, %c0_i32 : i32, i32
  }
  func.func @transform_19(%arg0: i32) -> (i32, i32) {
    %c0_i32 = arith.constant 0 : i32
    %c0_i32_0 = arith.constant 0 : i32
    return %arg0, %c0_i32 : i32, i32
  }
}

</mosaic_0001>

<llo_original>
// kernel: vae_forward.1
$region0: #{vae_forward.1}
  #allocation0 [shape = 'u32[]', space=smem, size = 0x4, offset = 0x4, fixed_abs, tag = 'smem constant byte address 0x4 - core index']
  #allocation1 [shape = 'u32[144,128]{1,0:T(1,128)}', space=vmem, size = 0x12000, scoped, tag = 'internal scratch']
  %s0 = inlined_call_operand.vmem [shape: bf16[128,256], index: 0, kind: input, shape index: {}]
  %s1 = inlined_call_operand.vmem [shape: f32[128,32], index: 1, kind: input, shape index: {}]
  %s2 = inlined_call_operand.vmem [shape: bf16[256,256], index: 2, kind: input, shape index: {}]
  %s3 = inlined_call_operand.vmem [shape: f32[1,256], index: 3, kind: input, shape index: {}]
  %s4 = inlined_call_operand.vmem [shape: bf16[256,128], index: 4, kind: input, shape index: {}]
  %s5 = inlined_call_operand.vmem [shape: f32[1,128], index: 5, kind: input, shape index: {}]
  %s6 = inlined_call_operand.vmem [shape: bf16[128,64], index: 6, kind: input, shape index: {}]
  %s7 = inlined_call_operand.vmem [shape: f32[1,64], index: 7, kind: input, shape index: {}]
  %s8 = inlined_call_operand.hbm [shape: bf16[64,128], index: 8, kind: input, shape index: {}]
  %s9 = inlined_call_operand.hbm [shape: f32[1,128], index: 9, kind: input, shape index: {}]
  %s10 = inlined_call_operand.vmem [shape: bf16[32,64], index: 10, kind: input, shape index: {}]
  %s11 = inlined_call_operand.hbm [shape: f32[1,64], index: 11, kind: input, shape index: {}]
  %s12 = inlined_call_operand.hbm [shape: bf16[64,64], index: 12, kind: input, shape index: {}]
  %s13 = inlined_call_operand.hbm [shape: f32[1,64], index: 13, kind: input, shape index: {}]
  %s14 = inlined_call_operand.hbm [shape: bf16[64,128], index: 14, kind: input, shape index: {}]
  %s15 = inlined_call_operand.hbm [shape: f32[1,128], index: 15, kind: input, shape index: {}]
  %s16 = inlined_call_operand.hbm [shape: bf16[128,256], index: 16, kind: input, shape index: {}]
  %s17 = inlined_call_operand.vmem [shape: f32[1,256], index: 17, kind: input, shape index: {}]
  %s18 = inlined_call_operand.vmem [shape: f32[128,256], index: 18, kind: output, shape index: {0}]
  %s19 = inlined_call_operand.vmem [shape: f32[128,128], index: 19, kind: output, shape index: {1}]
  %20 = xla_tuple %s18, %s19
  %s21 = sld [smem:[#allocation0]]
  $region122: #{vae_forward.1} parent=0
    _
  %s23 = ssub.s32 1, %s21
  %s24 = scalar_select 0, %s23, %s21
  $region1: #{vae_forward.1} parent=0
    #allocation2 [shape = 'u8[16384]{0}', space=vmem, size = 0x4000, scoped, tag = 'input window, operand 8, single buffered']
    #allocation3 [shape = 's32[1]{0}', space=sflag, size = 0x4, scoped, tag = 'scoped memory for vae_forward.1']
    #allocation4 [shape = 'u8[512]{0}', space=vmem, size = 0x400, scoped, tag = 'input window, operand 9, single buffered']
    #allocation5 [shape = 's32[1]{0}', space=sflag, size = 0x4, scoped, tag = 'scoped memory for vae_forward.1']
    #allocation6 [shape = 'u8[512]{0}', space=vmem, size = 0x400, scoped, tag = 'input window, operand 11, single buffered']
    #allocation7 [shape = 'u8[16384]{0}', space=vmem, size = 0x4000, scoped, tag = 'input window, operand 12, single buffered']
    #allocation8 [shape = 's32[1]{0}', space=sflag, size = 0x4, scoped, tag = 'scoped memory for vae_forward.1']
    #allocation9 [shape = 'u8[512]{0}', space=vmem, size = 0x400, scoped, tag = 'input window, operand 13, single buffered']
    #allocation10 [shape = 'u8[16384]{0}', space=vmem, size = 0x4000, scoped, tag = 'input window, operand 14, single buffered']
    #allocation11 [shape = 's32[1]{0}', space=sflag, size = 0x4, scoped, tag = 'scoped memory for vae_forward.1']
    #allocation12 [shape = 'u8[512]{0}', space=vmem, size = 0x400, scoped, tag = 'input window, operand 15, single buffered']
    #allocation13 [shape = 'u8[65536]{0}', space=vmem, size = 0x10000, scoped, tag = 'input window, operand 16, single buffered']
    #allocation14 [shape = 's32[1]{0}', space=sflag, size = 0x4, scoped, tag = 'scoped memory for vae_forward.1']
    %25 = vsyncpa [#allocation3], 0
    %26 = vsyncpa [#allocation5], 0
    %27 = vsyncpa [#allocation8], 0
    %28 = vsyncpa [#allocation11], 0
    %29 = vsyncpa [#allocation14], 0
    // Predicated region
    $region2: #{vae_forward.1} parent=1 // pred_check
      _
    $region3: #{vae_forward.1} parent=1 // pred_check_branch
      %31 = sbr.rel (0) target = $region5
    $region4: #{vae_forward.1} parent=1 // pred_region
      _
    $region5: #{vae_forward.1} parent=1 // pred_fallthru
      _
    // Predicated region
    $region6: #{vae_forward.1} parent=1 // pred_check
      _
    $region7: #{vae_forward.1} parent=1 // pred_check_branch
      %33 = sbr.rel (0) target = $region9
    $region8: #{vae_forward.1} parent=1 // pred_region
      _
    $region9: #{vae_forward.1} parent=1 // pred_fallthru
      _
    // Predicated region
    $region10: #{vae_forward.1} parent=1 // pred_check
      _
    $region11: #{vae_forward.1} parent=1 // pred_check_branch
      %35 = sbr.rel (0) target = $region13
    $region12: #{vae_forward.1} parent=1 // pred_region
      _
    $region13: #{vae_forward.1} parent=1 // pred_fallthru
      _
    // Predicated region
    $region14: #{vae_forward.1} parent=1 // pred_check
      _
    $region15: #{vae_forward.1} parent=1 // pred_check_branch
      %37 = sbr.rel (0) target = $region17
    $region16: #{vae_forward.1} parent=1 // pred_region
      _
    $region17: #{vae_forward.1} parent=1 // pred_fallthru
      _
    // Predicated region
    $region18: #{vae_forward.1} parent=1 // pred_check
      _
    $region19: #{vae_forward.1} parent=1 // pred_check_branch
      %39 = sbr.rel (0) target = $region21
    $region20: #{vae_forward.1} parent=1 // pred_region
      _
    $region21: #{vae_forward.1} parent=1 // pred_fallthru
      _
    // Predicated region
    $region22: #{vae_forward.1} parent=1 // pred_check
      _
    $region23: #{vae_forward.1} parent=1 // pred_check_branch
      %41 = sbr.rel (0) target = $region25
    $region24: #{vae_forward.1} parent=1 // pred_region
      _
    $region25: #{vae_forward.1} parent=1 // pred_fallthru
      _
    // Predicated region
    $region26: #{vae_forward.1} parent=1 // pred_check
      _
    $region27: #{vae_forward.1} parent=1 // pred_check_branch
      %43 = sbr.rel (0) target = $region29
    $region28: #{vae_forward.1} parent=1 // pred_region
      _
    $region29: #{vae_forward.1} parent=1 // pred_fallthru
      _
    // Predicated region
    $region30: #{vae_forward.1} parent=1 // pred_check
      _
    $region31: #{vae_forward.1} parent=1 // pred_check_branch
      %45 = sbr.rel (0) target = $region33
    $region32: #{vae_forward.1} parent=1 // pred_region
      _
    $region33: #{vae_forward.1} parent=1 // pred_fallthru
      _
    // Predicated region
    $region34: #{vae_forward.1} parent=1 // pred_check
      _
    $region35: #{vae_forward.1} parent=1 // pred_check_branch
      %47 = sbr.rel (0) target = $region37
    $region36: #{vae_forward.1} parent=1 // pred_region
      %s49 = ssub.s32 512, 512
      %50 = vsyncadd [#allocation3], %s49
      %s51 = sshll.u32 [#allocation2], 4
      %s52 = int_to_ptr.vmem [resolvable:$true] %s51
      %57 = dma.hbm_to_vmem [thread:$0]  %s8, 512, %s52, [#allocation3], 64, 64, 4
    $region37: #{vae_forward.1} parent=1 // pred_fallthru
      _
    // Predicated region
    $region38: #{vae_forward.1} parent=1 // pred_check
      _
    $region39: #{vae_forward.1} parent=1 // pred_check_branch
      %59 = sbr.rel (0) target = $region41
    $region40: #{vae_forward.1} parent=1 // pred_region
      %s61 = ssub.s32 16, 16
      %62 = vsyncadd [#allocation5], %s61
      %s64 = sshll.u32 [#allocation4], 4
      %s65 = int_to_ptr.vmem [resolvable:$true] %s64
      %67 = dma.hbm_to_vmem [thread:$0]  %s9, 16, %s65, [#allocation5]
    $region41: #{vae_forward.1} parent=1 // pred_fallthru
      _
    // Predicated region
    $region42: #{vae_forward.1} parent=1 // pred_check
      _
    $region43: #{vae_forward.1} parent=1 // pred_check_branch
      %69 = sbr.rel (0) target = $region45
    $region44: #{vae_forward.1} parent=1 // pred_region
      _
    $region45: #{vae_forward.1} parent=1 // pred_fallthru
      _
    // Predicated region
    $region46: #{vae_forward.1} parent=1 // pred_check
      _
    $region47: #{vae_forward.1} parent=1 // pred_check_branch
      %71 = sbr.rel (0) target = $region49
    $region48: #{vae_forward.1} parent=1 // pred_region
      %s73 = ssub.s32 16, 16
      %74 = vsyncadd [#allocation5], %s73
      %s76 = sshll.u32 [#allocation6], 4
      %s77 = int_to_ptr.vmem [resolvable:$true] %s76
      %79 = dma.hbm_to_vmem [thread:$0]  %s11, 16, %s77, [#allocation5]
    $region49: #{vae_forward.1} parent=1 // pred_fallthru
      _
    // Predicated region
    $region50: #{vae_forward.1} parent=1 // pred_check
      _
    $region51: #{vae_forward.1} parent=1 // pred_check_branch
      %81 = sbr.rel (0) target = $region53
    $region52: #{vae_forward.1} parent=1 // pred_region
      %s83 = ssub.s32 512, 512
      %84 = vsyncadd [#allocation8], %s83
      %s85 = sshll.u32 [#allocation7], 4
      %s86 = int_to_ptr.vmem [resolvable:$true] %s85
      %91 = dma.hbm_to_vmem [thread:$0]  %s12, 512, %s86, [#allocation8], 64, 64, 4
    $region53: #{vae_forward.1} parent=1 // pred_fallthru
      _
    // Predicated region
    $region54: #{vae_forward.1} parent=1 // pred_check
      _
    $region55: #{vae_forward.1} parent=1 // pred_check_branch
      %93 = sbr.rel (0) target = $region57
    $region56: #{vae_forward.1} parent=1 // pred_region
      %s95 = ssub.s32 16, 16
      %96 = vsyncadd [#allocation8], %s95
      %s98 = sshll.u32 [#allocation9], 4
      %s99 = int_to_ptr.vmem [resolvable:$true] %s98
      %101 = dma.hbm_to_vmem [thread:$0]  %s13, 16, %s99, [#allocation8]
    $region57: #{vae_forward.1} parent=1 // pred_fallthru
      _
    // Predicated region
    $region58: #{vae_forward.1} parent=1 // pred_check
      _
    $region59: #{vae_forward.1} parent=1 // pred_check_branch
      %103 = sbr.rel (0) target = $region61
    $region60: #{vae_forward.1} parent=1 // pred_region
      %s105 = ssub.s32 512, 512
      %106 = vsyncadd [#allocation11], %s105
      %s107 = sshll.u32 [#allocation10], 4
      %s108 = int_to_ptr.vmem [resolvable:$true] %s107
      %113 = dma.hbm_to_vmem [thread:$0]  %s14, 512, %s108, [#allocation11], 64, 64, 4
    $region61: #{vae_forward.1} parent=1 // pred_fallthru
      _
    // Predicated region
    $region62: #{vae_forward.1} parent=1 // pred_check
      _
    $region63: #{vae_forward.1} parent=1 // pred_check_branch
      %115 = sbr.rel (0) target = $region65
    $region64: #{vae_forward.1} parent=1 // pred_region
      %s117 = ssub.s32 16, 16
      %118 = vsyncadd [#allocation11], %s117
      %s120 = sshll.u32 [#allocation12], 4
      %s121 = int_to_ptr.vmem [resolvable:$true] %s120
      %123 = dma.hbm_to_vmem [thread:$0]  %s15, 16, %s121, [#allocation11]
    $region65: #{vae_forward.1} parent=1 // pred_fallthru
      _
    // Predicated region
    $region66: #{vae_forward.1} parent=1 // pred_check
      _
    $region67: #{vae_forward.1} parent=1 // pred_check_branch
      %125 = sbr.rel (0) target = $region69
    $region68: #{vae_forward.1} parent=1 // pred_region
      %s127 = ssub.s32 2048, 2048
      %128 = vsyncadd [#allocation14], %s127
      %s129 = sshll.u32 [#allocation13], 4
      %s130 = int_to_ptr.vmem [resolvable:$true] %s129
      %135 = dma.hbm_to_vmem [thread:$0]  %s16, 2048, %s130, [#allocation14], 128, 128, 8
    $region69: #{vae_forward.1} parent=1 // pred_fallthru
      _
    // Predicated region
    $region70: #{vae_forward.1} parent=1 // pred_check
      _
    $region71: #{vae_forward.1} parent=1 // pred_check_branch
      %137 = sbr.rel (0) target = $region73
    $region72: #{vae_forward.1} parent=1 // pred_region
      _
    $region73: #{vae_forward.1} parent=1 // pred_fallthru
      _
    // Predicated region
    $region74: #{vae_forward.1} parent=1 // pred_check
      _
    $region75: #{vae_forward.1} parent=1 // pred_check_branch
      %139 = sbr.rel (0) target = $region77
    $region76: #{vae_forward.1} parent=1 // pred_region
      %140 = dma.done [#allocation3], 512
    $region77: #{vae_forward.1} parent=1 // pred_fallthru
      _
    // Predicated region
    $region78: #{vae_forward.1} parent=1 // pred_check
      _
    $region79: #{vae_forward.1} parent=1 // pred_check_branch
      %142 = sbr.rel (0) target = $region81
    $region80: #{vae_forward.1} parent=1 // pred_region
      %143 = dma.done [#allocation5], 16
    $region81: #{vae_forward.1} parent=1 // pred_fallthru
      _
    // Predicated region
    $region82: #{vae_forward.1} parent=1 // pred_check
      _
    $region83: #{vae_forward.1} parent=1 // pred_check_branch
      %145 = sbr.rel (0) target = $region85
    $region84: #{vae_forward.1} parent=1 // pred_region
      %146 = dma.done [#allocation5], 16
    $region85: #{vae_forward.1} parent=1 // pred_fallthru
      _
    // Predicated region
    $region86: #{vae_forward.1} parent=1 // pred_check
      _
    $region87: #{vae_forward.1} parent=1 // pred_check_branch
      %148 = sbr.rel (0) target = $region89
    $region88: #{vae_forward.1} parent=1 // pred_region
      %149 = dma.done [#allocation8], 512
    $region89: #{vae_forward.1} parent=1 // pred_fallthru
      _
    // Predicated region
    $region90: #{vae_forward.1} parent=1 // pred_check
      _
    $region91: #{vae_forward.1} parent=1 // pred_check_branch
      %151 = sbr.rel (0) target = $region93
    $region92: #{vae_forward.1} parent=1 // pred_region
      %152 = dma.done [#allocation8], 16
    $region93: #{vae_forward.1} parent=1 // pred_fallthru
      _
    // Predicated region
    $region94: #{vae_forward.1} parent=1 // pred_check
      _
    $region95: #{vae_forward.1} parent=1 // pred_check_branch
      %154 = sbr.rel (0) target = $region97
    $region96: #{vae_forward.1} parent=1 // pred_region
      %155 = dma.done [#allocation11], 512
    $region97: #{vae_forward.1} parent=1 // pred_fallthru
      _
    // Predicated region
    $region98: #{vae_forward.1} parent=1 // pred_check
      _
    $region99: #{vae_forward.1} parent=1 // pred_check_branch
      %157 = sbr.rel (0) target = $region101
    $region100: #{vae_forward.1} parent=1 // pred_region
      %158 = dma.done [#allocation11], 16
    $region101: #{vae_forward.1} parent=1 // pred_fallthru
      _
    // Predicated region
    $region102: #{vae_forward.1} parent=1 // pred_check
      _
    $region103: #{vae_forward.1} parent=1 // pred_check_branch
      %160 = sbr.rel (0) target = $region105
    $region104: #{vae_forward.1} parent=1 // pred_region
      %161 = dma.done [#allocation14], 2048
    $region105: #{vae_forward.1} parent=1 // pred_fallthru
      _
    %v163 = vld [vmem:[%s0] sm:$0xff]
    %v164 = vld [vmem:[%s0 + $0x8] sm:$0xff]
    %v165 = vld [vmem:[%s0 + $0x10] sm:$0xff]
    %v166 = vld [vmem:[%s0 + $0x18] sm:$0xff]
    %v167 = vld [vmem:[%s0 + $0x20] sm:$0xff]
    %v168 = vld [vmem:[%s0 + $0x28] sm:$0xff]
    %v169 = vld [vmem:[%s0 + $0x30] sm:$0xff]
    %v170 = vld [vmem:[%s0 + $0x38] sm:$0xff]
    %v171 = vld [vmem:[%s0 + $0x40] sm:$0xff]
    %v172 = vld [vmem:[%s0 + $0x48] sm:$0xff]
    %v173 = vld [vmem:[%s0 + $0x50] sm:$0xff]
    %v174 = vld [vmem:[%s0 + $0x58] sm:$0xff]
    %v175 = vld [vmem:[%s0 + $0x60] sm:$0xff]
    %v176 = vld [vmem:[%s0 + $0x68] sm:$0xff]
    %v177 = vld [vmem:[%s0 + $0x70] sm:$0xff]
    %v178 = vld [vmem:[%s0 + $0x78] sm:$0xff]
    %v179 = vld [vmem:[%s2] sm:$0xff]
    %v180 = vld [vmem:[%s2 + $0x8] sm:$0xff]
    %v181 = vld [vmem:[%s2 + $0x10] sm:$0xff]
    %v182 = vld [vmem:[%s2 + $0x18] sm:$0xff]
    %v183 = vld [vmem:[%s2 + $0x20] sm:$0xff]
    %v184 = vld [vmem:[%s2 + $0x28] sm:$0xff]
    %v185 = vld [vmem:[%s2 + $0x30] sm:$0xff]
    %v186 = vld [vmem:[%s2 + $0x38] sm:$0xff]
    %v187 = vld [vmem:[%s2 + $0x40] sm:$0xff]
    %v188 = vld [vmem:[%s2 + $0x48] sm:$0xff]
    %v189 = vld [vmem:[%s2 + $0x50] sm:$0xff]
    %v190 = vld [vmem:[%s2 + $0x58] sm:$0xff]
    %v191 = vld [vmem:[%s2 + $0x60] sm:$0xff]
    %v192 = vld [vmem:[%s2 + $0x68] sm:$0xff]
    %v193 = vld [vmem:[%s2 + $0x70] sm:$0xff]
    %v194 = vld [vmem:[%s2 + $0x78] sm:$0xff]
    %v195 = vld [vmem:[%s2 + $0x80] sm:$0xff]
    %v196 = vld [vmem:[%s2 + $0x88] sm:$0xff]
    %v197 = vld [vmem:[%s2 + $0x90] sm:$0xff]
    %v198 = vld [vmem:[%s2 + $0x98] sm:$0xff]
    %v199 = vld [vmem:[%s2 + $0xa0] sm:$0xff]
    %v200 = vld [vmem:[%s2 + $0xa8] sm:$0xff]
    %v201 = vld [vmem:[%s2 + $0xb0] sm:$0xff]
    %v202 = vld [vmem:[%s2 + $0xb8] sm:$0xff]
    %v203 = vld [vmem:[%s2 + $0xc0] sm:$0xff]
    %v204 = vld [vmem:[%s2 + $0xc8] sm:$0xff]
    %v205 = vld [vmem:[%s2 + $0xd0] sm:$0xff]
    %v206 = vld [vmem:[%s2 + $0xd8] sm:$0xff]
    %v207 = vld [vmem:[%s2 + $0xe0] sm:$0xff]
    %v208 = vld [vmem:[%s2 + $0xe8] sm:$0xff]
    %v209 = vld [vmem:[%s2 + $0xf0] sm:$0xff]
    %v210 = vld [vmem:[%s2 + $0xf8] sm:$0xff]
    %v211 = vld [vmem:[%s3] sm:$0x3]
    %v213 = vlaneseq
    %v214 = vshrl.u32 %v213, 7
    %v215 = vsub.s32 0, %v214
    %v216 = vrot.slane %v211, %v215
    %v217 = vlaneseq
    %v218 = vshrl.u32 %v217, 7
    %v219 = vsub.s32 1, %v218
    %v220 = vrot.slane %v211, %v219
    %v239 = vunpack.c.l.b16 %v163
    %v240 = vunpack.c.h.b16 %v163
    %v241 = vunpack.c.l.b16 %v164
    %v242 = vunpack.c.h.b16 %v164
    %v243 = vunpack.c.l.b16 %v165
    %v244 = vunpack.c.h.b16 %v165
    %v245 = vunpack.c.l.b16 %v166
    %v246 = vunpack.c.h.b16 %v166
    %v247 = vunpack.c.l.b16 %v167
    %v248 = vunpack.c.h.b16 %v167
    %v249 = vunpack.c.l.b16 %v168
    %v250 = vunpack.c.h.b16 %v168
    %v251 = vunpack.c.l.b16 %v169
    %v252 = vunpack.c.h.b16 %v169
    %v253 = vunpack.c.l.b16 %v170
    %v254 = vunpack.c.h.b16 %v170
    %v255 = vunpack.c.l.b16 %v171
    %v256 = vunpack.c.h.b16 %v171
    %v257 = vunpack.c.l.b16 %v172
    %v258 = vunpack.c.h.b16 %v172
    %v259 = vunpack.c.l.b16 %v173
    %v260 = vunpack.c.h.b16 %v173
    %v261 = vunpack.c.l.b16 %v174
    %v262 = vunpack.c.h.b16 %v174
    %v263 = vunpack.c.l.b16 %v175
    %v264 = vunpack.c.h.b16 %v175
    %v265 = vunpack.c.l.b16 %v176
    %v266 = vunpack.c.h.b16 %v176
    %v267 = vunpack.c.l.b16 %v177
    %v268 = vunpack.c.h.b16 %v177
    %v269 = vunpack.c.l.b16 %v178
    %v270 = vunpack.c.h.b16 %v178
    %v271 = vpack.c.b16 %v241, %v239
    %v272 = vpack.c.b16 %v242, %v240
    %v273 = vpack.c.b16 %v245, %v243
    %v274 = vpack.c.b16 %v246, %v244
    %v275 = vpack.c.b16 %v249, %v247
    %v276 = vpack.c.b16 %v250, %v248
    %v277 = vpack.c.b16 %v253, %v251
    %v278 = vpack.c.b16 %v254, %v252
    %v279 = vpack.c.b16 %v257, %v255
    %v280 = vpack.c.b16 %v258, %v256
    %v281 = vpack.c.b16 %v261, %v259
    %v282 = vpack.c.b16 %v262, %v260
    %v283 = vpack.c.b16 %v265, %v263
    %v284 = vpack.c.b16 %v266, %v264
    %v285 = vpack.c.b16 %v269, %v267
    %v286 = vpack.c.b16 %v270, %v268
    %v335 = vunpack.c.l.b16 %v179
    %v336 = vunpack.c.h.b16 %v179
    %v337 = vunpack.c.l.b16 %v180
    %v338 = vunpack.c.h.b16 %v180
    %v339 = vunpack.c.l.b16 %v181
    %v340 = vunpack.c.h.b16 %v181
    %v341 = vunpack.c.l.b16 %v182
    %v342 = vunpack.c.h.b16 %v182
    %v343 = vunpack.c.l.b16 %v183
    %v344 = vunpack.c.h.b16 %v183
    %v345 = vunpack.c.l.b16 %v184
    %v346 = vunpack.c.h.b16 %v184
    %v347 = vunpack.c.l.b16 %v185
    %v348 = vunpack.c.h.b16 %v185
    %v349 = vunpack.c.l.b16 %v186
    %v350 = vunpack.c.h.b16 %v186
    %v351 = vunpack.c.l.b16 %v187
    %v352 = vunpack.c.h.b16 %v187
    %v353 = vunpack.c.l.b16 %v188
    %v354 = vunpack.c.h.b16 %v188
    %v355 = vunpack.c.l.b16 %v189
    %v356 = vunpack.c.h.b16 %v189
    %v357 = vunpack.c.l.b16 %v190
    %v358 = vunpack.c.h.b16 %v190
    %v359 = vunpack.c.l.b16 %v191
    %v360 = vunpack.c.h.b16 %v191
    %v361 = vunpack.c.l.b16 %v192
    %v362 = vunpack.c.h.b16 %v192
    %v363 = vunpack.c.l.b16 %v193
    %v364 = vunpack.c.h.b16 %v193
    %v365 = vunpack.c.l.b16 %v194
    %v366 = vunpack.c.h.b16 %v194
    %v367 = vunpack.c.l.b16 %v195
    %v368 = vunpack.c.h.b16 %v195
    %v369 = vunpack.c.l.b16 %v196
    %v370 = vunpack.c.h.b16 %v196
    %v371 = vunpack.c.l.b16 %v197
    %v372 = vunpack.c.h.b16 %v197
    %v373 = vunpack.c.l.b16 %v198
    %v374 = vunpack.c.h.b16 %v198
    %v375 = vunpack.c.l.b16 %v199
    %v376 = vunpack.c.h.b16 %v199
    %v377 = vunpack.c.l.b16 %v200
    %v378 = vunpack.c.h.b16 %v200
    %v379 = vunpack.c.l.b16 %v201
    %v380 = vunpack.c.h.b16 %v201
    %v381 = vunpack.c.l.b16 %v202
    %v382 = vunpack.c.h.b16 %v202
    %v383 = vunpack.c.l.b16 %v203
    %v384 = vunpack.c.h.b16 %v203
    %v385 = vunpack.c.l.b16 %v204
    %v386 = vunpack.c.h.b16 %v204
    %v387 = vunpack.c.l.b16 %v205
    %v388 = vunpack.c.h.b16 %v205
    %v389 = vunpack.c.l.b16 %v206
    %v390 = vunpack.c.h.b16 %v206
    %v391 = vunpack.c.l.b16 %v207
    %v392 = vunpack.c.h.b16 %v207
    %v393 = vunpack.c.l.b16 %v208
    %v394 = vunpack.c.h.b16 %v208
    %v395 = vunpack.c.l.b16 %v209
    %v396 = vunpack.c.h.b16 %v209
    %v397 = vunpack.c.l.b16 %v210
    %v398 = vunpack.c.h.b16 %v210
    %v399 = vpack.c.b16 %v337, %v335
    %v400 = vpack.c.b16 %v338, %v336
    %v401 = vpack.c.b16 %v341, %v339
    %v402 = vpack.c.b16 %v342, %v340
    %v403 = vpack.c.b16 %v345, %v343
    %v404 = vpack.c.b16 %v346, %v344
    %v405 = vpack.c.b16 %v349, %v347
    %v406 = vpack.c.b16 %v350, %v348
    %v407 = vpack.c.b16 %v353, %v351
    %v408 = vpack.c.b16 %v354, %v352
    %v409 = vpack.c.b16 %v357, %v355
    %v410 = vpack.c.b16 %v358, %v356
    %v411 = vpack.c.b16 %v361, %v359
    %v412 = vpack.c.b16 %v362, %v360
    %v413 = vpack.c.b16 %v365, %v363
    %v414 = vpack.c.b16 %v366, %v364
    %v415 = vpack.c.b16 %v369, %v367
    %v416 = vpack.c.b16 %v370, %v368
    %v417 = vpack.c.b16 %v373, %v371
    %v418 = vpack.c.b16 %v374, %v372
    %v419 = vpack.c.b16 %v377, %v375
    %v420 = vpack.c.b16 %v378, %v376
    %v421 = vpack.c.b16 %v381, %v379
    %v422 = vpack.c.b16 %v382, %v380
    %v423 = vpack.c.b16 %v385, %v383
    %v424 = vpack.c.b16 %v386, %v384
    %v425 = vpack.c.b16 %v389, %v387
    %v426 = vpack.c.b16 %v390, %v388
    %v427 = vpack.c.b16 %v393, %v391
    %v428 = vpack.c.b16 %v394, %v392
    %v429 = vpack.c.b16 %v397, %v395
    %v430 = vpack.c.b16 %v398, %v396
    %463 = vmatprep.subr.bf16.mxu0 %v414
    %464 = vmatpush1.bf16.msra.mxu0 %v413
    %465 = vmatprep.subr.bf16.mxu0 %v412
    %466 = vmatpush1.bf16.msra.mxu0 %v411
    %467 = vmatprep.subr.bf16.mxu0 %v410
    %468 = vmatpush1.bf16.msra.mxu0 %v409
    %469 = vmatprep.subr.bf16.mxu0 %v408
    %470 = vmatpush1.bf16.msra.mxu0 %v407
    %471 = vmatprep.subr.bf16.mxu0 %v406
    %472 = vmatpush1.bf16.msra.mxu0 %v405
    %473 = vmatprep.subr.bf16.mxu0 %v404
    %474 = vmatpush1.bf16.msra.mxu0 %v403
    %475 = vmatprep.subr.bf16.mxu0 %v402
    %476 = vmatpush1.bf16.msra.mxu0 %v401
    %477 = vmatprep.subr.bf16.mxu0 %v400
    %478 = vmatpush1.bf16.msra.mxu0 %v399
    %479 = vmatprep.subr.bf16.mxu0 %v430
    %480 = vmatpush2.bf16.msra.mxu0 %v429
    %481 = vmatprep.subr.bf16.mxu0 %v428
    %482 = vmatpush2.bf16.msra.mxu0 %v427
    %483 = vmatprep.subr.bf16.mxu0 %v426
    %484 = vmatpush2.bf16.msra.mxu0 %v425
    %485 = vmatprep.subr.bf16.mxu0 %v424
    %486 = vmatpush2.bf16.msra.mxu0 %v423
    %487 = vmatprep.subr.bf16.mxu0 %v422
    %488 = vmatpush2.bf16.msra.mxu0 %v421
    %489 = vmatprep.subr.bf16.mxu0 %v420
    %490 = vmatpush2.bf16.msra.mxu0 %v419
    %491 = vmatprep.subr.bf16.mxu0 %v418
    %492 = vmatpush2.bf16.msra.mxu0 %v417
    %493 = vmatprep.subr.bf16.mxu0 %v416
    %494 = vmatpush2.bf16.msra.mxu0 %v415
    %495 = vmatprep.mubr.bf16.mxu0 %v272
    %496 = vmatmul.mubr.bf16.gmra.mxu0 %v271
    %v497 = vpop.f32.mrf.mxu0
    %v498 = vadd.f32 %v216, %v497
    %v499 = vpop.f32.mrf.mxu0
    %v500 = vadd.f32 %v220, %v499
    %v501 = vpop.f32.mrf.mxu0
    %v502 = vadd.f32 %v216, %v501
    %v503 = vpop.f32.mrf.mxu0
    %v504 = vadd.f32 %v220, %v503
    %505 = vmatprep.mubr.bf16.mxu0 %v274
    %506 = vmatmul.mubr.bf16.gmra.mxu0 %v273
    %v507 = vpop.f32.mrf.mxu0
    %v508 = vadd.f32 %v216, %v507
    %v509 = vpop.f32.mrf.mxu0
    %v510 = vadd.f32 %v220, %v509
    %v511 = vpop.f32.mrf.mxu0
    %v512 = vadd.f32 %v216, %v511
    %v513 = vpop.f32.mrf.mxu0
    %v514 = vadd.f32 %v220, %v513
    %515 = vmatprep.mubr.bf16.mxu0 %v276
    %516 = vmatmul.mubr.bf16.gmra.mxu0 %v275
    %v517 = vpop.f32.mrf.mxu0
    %v518 = vadd.f32 %v216, %v517
    %v519 = vpop.f32.mrf.mxu0
    %v520 = vadd.f32 %v220, %v519
    %v521 = vpop.f32.mrf.mxu0
    %v522 = vadd.f32 %v216, %v521
    %v523 = vpop.f32.mrf.mxu0
    %v524 = vadd.f32 %v220, %v523
    %525 = vmatprep.mubr.bf16.mxu0 %v278
    %526 = vmatmul.mubr.bf16.gmra.mxu0 %v277
    %v527 = vpop.f32.mrf.mxu0
    %v528 = vadd.f32 %v216, %v527
    %v529 = vpop.f32.mrf.mxu0
    %v530 = vadd.f32 %v220, %v529
    %v531 = vpop.f32.mrf.mxu0
    %v532 = vadd.f32 %v216, %v531
    %v533 = vpop.f32.mrf.mxu0
    %v534 = vadd.f32 %v220, %v533
    %535 = vmatprep.mubr.bf16.mxu0 %v280
    %536 = vmatmul.mubr.bf16.gmra.mxu0 %v279
    %v537 = vpop.f32.mrf.mxu0
    %v538 = vadd.f32 %v216, %v537
    %v539 = vpop.f32.mrf.mxu0
    %v540 = vadd.f32 %v220, %v539
    %v541 = vpop.f32.mrf.mxu0
    %v542 = vadd.f32 %v216, %v541
    %v543 = vpop.f32.mrf.mxu0
    %v544 = vadd.f32 %v220, %v543
    %545 = vmatprep.mubr.bf16.mxu0 %v282
    %546 = vmatmul.mubr.bf16.gmra.mxu0 %v281
    %v547 = vpop.f32.mrf.mxu0
    %v548 = vadd.f32 %v216, %v547
    %v549 = vpop.f32.mrf.mxu0
    %v550 = vadd.f32 %v220, %v549
    %v551 = vpop.f32.mrf.mxu0
    %v552 = vadd.f32 %v216, %v551
    %v553 = vpop.f32.mrf.mxu0
    %v554 = vadd.f32 %v220, %v553
    %555 = vmatprep.mubr.bf16.mxu0 %v284
    %556 = vmatmul.mubr.bf16.gmra.mxu0 %v283
    %v557 = vpop.f32.mrf.mxu0
    %v558 = vadd.f32 %v216, %v557
    %v559 = vpop.f32.mrf.mxu0
    %v560 = vadd.f32 %v220, %v559
    %v561 = vpop.f32.mrf.mxu0
    %v562 = vadd.f32 %v216, %v561
    %v563 = vpop.f32.mrf.mxu0
    %v564 = vadd.f32 %v220, %v563
    %565 = vmatprep.mubr.bf16.mxu0 %v286
    %566 = vmatmul.mubr.bf16.gmra.mxu0 %v285
    %v567 = vpop.f32.mrf.mxu0
    %v568 = vadd.f32 %v216, %v567
    %v569 = vpop.f32.mrf.mxu0
    %v570 = vadd.f32 %v220, %v569
    %v571 = vpop.f32.mrf.mxu0
    %v572 = vadd.f32 %v216, %v571
    %v573 = vpop.f32.mrf.mxu0
    %v574 = vadd.f32 %v220, %v573
    %575 = vdwg.mxu0
    %v576 = vmax.f32 %v498, 0.0
    %v577 = vmax.f32 %v500, 0.0
    %v578 = vmax.f32 %v502, 0.0
    %v579 = vmax.f32 %v504, 0.0
    %v580 = vmax.f32 %v508, 0.0
    %v581 = vmax.f32 %v510, 0.0
    %v582 = vmax.f32 %v512, 0.0
    %v583 = vmax.f32 %v514, 0.0
    %v584 = vmax.f32 %v518, 0.0
    %v585 = vmax.f32 %v520, 0.0
    %v586 = vmax.f32 %v522, 0.0
    %v587 = vmax.f32 %v524, 0.0
    %v588 = vmax.f32 %v528, 0.0
    %v589 = vmax.f32 %v530, 0.0
    %v590 = vmax.f32 %v532, 0.0
    %v591 = vmax.f32 %v534, 0.0
    %v592 = vmax.f32 %v538, 0.0
    %v593 = vmax.f32 %v540, 0.0
    %v594 = vmax.f32 %v542, 0.0
    %v595 = vmax.f32 %v544, 0.0
    %v596 = vmax.f32 %v548, 0.0
    %v597 = vmax.f32 %v550, 0.0
    %v598 = vmax.f32 %v552, 0.0
    %v599 = vmax.f32 %v554, 0.0
    %v600 = vmax.f32 %v558, 0.0
    %v601 = vmax.f32 %v560, 0.0
    %v602 = vmax.f32 %v562, 0.0
    %v603 = vmax.f32 %v564, 0.0
    %v604 = vmax.f32 %v568, 0.0
    %v605 = vmax.f32 %v570, 0.0
    %v606 = vmax.f32 %v572, 0.0
    %v607 = vmax.f32 %v574, 0.0
    %v608 = vpack.c.bf16 %v578, %v576
    %v609 = vpack.c.bf16 %v579, %v577
    %v610 = vpack.c.bf16 %v582, %v580
    %v611 = vpack.c.bf16 %v583, %v581
    %v612 = vpack.c.bf16 %v586, %v584
    %v613 = vpack.c.bf16 %v587, %v585
    %v614 = vpack.c.bf16 %v590, %v588
    %v615 = vpack.c.bf16 %v591, %v589
    %v616 = vpack.c.bf16 %v594, %v592
    %v617 = vpack.c.bf16 %v595, %v593
    %v618 = vpack.c.bf16 %v598, %v596
    %v619 = vpack.c.bf16 %v599, %v597
    %v620 = vpack.c.bf16 %v602, %v600
    %v621 = vpack.c.bf16 %v603, %v601
    %v622 = vpack.c.bf16 %v606, %v604
    %v623 = vpack.c.bf16 %v607, %v605
    %v624 = vld [vmem:[%s4] sm:$0xf]
    %v625 = vld [vmem:[%s4 + $0x4] sm:$0xf]
    %v626 = vld [vmem:[%s4 + $0x8] sm:$0xf]
    %v627 = vld [vmem:[%s4 + $0xc] sm:$0xf]
    %v628 = vld [vmem:[%s4 + $0x10] sm:$0xf]
    %v629 = vld [vmem:[%s4 + $0x14] sm:$0xf]
    %v630 = vld [vmem:[%s4 + $0x18] sm:$0xf]
    %v631 = vld [vmem:[%s4 + $0x1c] sm:$0xf]
    %v632 = vld [vmem:[%s4 + $0x20] sm:$0xf]
    %v633 = vld [vmem:[%s4 + $0x24] sm:$0xf]
    %v634 = vld [vmem:[%s4 + $0x28] sm:$0xf]
    %v635 = vld [vmem:[%s4 + $0x2c] sm:$0xf]
    %v636 = vld [vmem:[%s4 + $0x30] sm:$0xf]
    %v637 = vld [vmem:[%s4 + $0x34] sm:$0xf]
    %v638 = vld [vmem:[%s4 + $0x38] sm:$0xf]
    %v639 = vld [vmem:[%s4 + $0x3c] sm:$0xf]
    %v640 = vld [vmem:[%s4 + $0x40] sm:$0xf]
    %v641 = vld [vmem:[%s4 + $0x44] sm:$0xf]
    %v642 = vld [vmem:[%s4 + $0x48] sm:$0xf]
    %v643 = vld [vmem:[%s4 + $0x4c] sm:$0xf]
    %v644 = vld [vmem:[%s4 + $0x50] sm:$0xf]
    %v645 = vld [vmem:[%s4 + $0x54] sm:$0xf]
    %v646 = vld [vmem:[%s4 + $0x58] sm:$0xf]
    %v647 = vld [vmem:[%s4 + $0x5c] sm:$0xf]
    %v648 = vld [vmem:[%s4 + $0x60] sm:$0xf]
    %v649 = vld [vmem:[%s4 + $0x64] sm:$0xf]
    %v650 = vld [vmem:[%s4 + $0x68] sm:$0xf]
    %v651 = vld [vmem:[%s4 + $0x6c] sm:$0xf]
    %v652 = vld [vmem:[%s4 + $0x70] sm:$0xf]
    %v653 = vld [vmem:[%s4 + $0x74] sm:$0xf]
    %v654 = vld [vmem:[%s4 + $0x78] sm:$0xf]
    %v655 = vld [vmem:[%s4 + $0x7c] sm:$0xf]
    %v656 = vld [vmem:[%s5] sm:$0x1]
    %v658 = vlaneseq
    %v659 = vshrl.u32 %v658, 7
    %v660 = vsub.s32 0, %v659
    %v661 = vrot.slane %v656, %v660
    %v695 = vunpack.c.l.b16 %v624
    %v696 = vunpack.c.l.b16 %v625
    %v697 = vunpack.c.l.b16 %v626
    %v698 = vunpack.c.l.b16 %v627
    %v699 = vunpack.c.l.b16 %v628
    %v700 = vunpack.c.l.b16 %v629
    %v701 = vunpack.c.l.b16 %v630
    %v702 = vunpack.c.l.b16 %v631
    %v703 = vunpack.c.l.b16 %v632
    %v704 = vunpack.c.l.b16 %v633
    %v705 = vunpack.c.l.b16 %v634
    %v706 = vunpack.c.l.b16 %v635
    %v707 = vunpack.c.l.b16 %v636
    %v708 = vunpack.c.l.b16 %v637
    %v709 = vunpack.c.l.b16 %v638
    %v710 = vunpack.c.l.b16 %v639
    %v711 = vunpack.c.l.b16 %v640
    %v712 = vunpack.c.l.b16 %v641
    %v713 = vunpack.c.l.b16 %v642
    %v714 = vunpack.c.l.b16 %v643
    %v715 = vunpack.c.l.b16 %v644
    %v716 = vunpack.c.l.b16 %v645
    %v717 = vunpack.c.l.b16 %v646
    %v718 = vunpack.c.l.b16 %v647
    %v719 = vunpack.c.l.b16 %v648
    %v720 = vunpack.c.l.b16 %v649
    %v721 = vunpack.c.l.b16 %v650
    %v722 = vunpack.c.l.b16 %v651
    %v723 = vunpack.c.l.b16 %v652
    %v724 = vunpack.c.l.b16 %v653
    %v725 = vunpack.c.l.b16 %v654
    %v726 = vunpack.c.l.b16 %v655
    %v727 = vpack.c.b16 %v696, %v695
    %v728 = vpack.c.b16 %v698, %v697
    %v729 = vpack.c.b16 %v700, %v699
    %v730 = vpack.c.b16 %v702, %v701
    %v731 = vpack.c.b16 %v704, %v703
    %v732 = vpack.c.b16 %v706, %v705
    %v733 = vpack.c.b16 %v708, %v707
    %v734 = vpack.c.b16 %v710, %v709
    %v735 = vpack.c.b16 %v712, %v711
    %v736 = vpack.c.b16 %v714, %v713
    %v737 = vpack.c.b16 %v716, %v715
    %v738 = vpack.c.b16 %v718, %v717
    %v739 = vpack.c.b16 %v720, %v719
    %v740 = vpack.c.b16 %v722, %v721
    %v741 = vpack.c.b16 %v724, %v723
    %v742 = vpack.c.b16 %v726, %v725
    %759 = vmatprep.subr.bf16.mxu0 0
    %760 = vmatpush1.bf16.msra.mxu0 %v734
    %761 = vmatprep.subr.bf16.mxu0 0
    %762 = vmatpush1.bf16.msra.mxu0 %v733
    %763 = vmatprep.subr.bf16.mxu0 0
    %764 = vmatpush1.bf16.msra.mxu0 %v732
    %765 = vmatprep.subr.bf16.mxu0 0
    %766 = vmatpush1.bf16.msra.mxu0 %v731
    %767 = vmatprep.subr.bf16.mxu0 0
    %768 = vmatpush1.bf16.msra.mxu0 %v730
    %769 = vmatprep.subr.bf16.mxu0 0
    %770 = vmatpush1.bf16.msra.mxu0 %v729
    %771 = vmatprep.subr.bf16.mxu0 0
    %772 = vmatpush1.bf16.msra.mxu0 %v728
    %773 = vmatprep.subr.bf16.mxu0 0
    %774 = vmatpush1.bf16.msra.mxu0 %v727
    %775 = vmatprep.subr.bf16.mxu0 0
    %776 = vmatpush2.bf16.msra.mxu0 %v742
    %777 = vmatprep.subr.bf16.mxu0 0
    %778 = vmatpush2.bf16.msra.mxu0 %v741
    %779 = vmatprep.subr.bf16.mxu0 0
    %780 = vmatpush2.bf16.msra.mxu0 %v740
    %781 = vmatprep.subr.bf16.mxu0 0
    %782 = vmatpush2.bf16.msra.mxu0 %v739
    %783 = vmatprep.subr.bf16.mxu0 0
    %784 = vmatpush2.bf16.msra.mxu0 %v738
    %785 = vmatprep.subr.bf16.mxu0 0
    %786 = vmatpush2.bf16.msra.mxu0 %v737
    %787 = vmatprep.subr.bf16.mxu0 0
    %788 = vmatpush2.bf16.msra.mxu0 %v736
    %789 = vmatprep.subr.bf16.mxu0 0
    %790 = vmatpush2.bf16.msra.mxu0 %v735
    %791 = vmatprep.mubr.bf16.mxu0 %v609
    %792 = vmatmul.mubr.bf16.gmra.mxu0 %v608
    %v793 = vpop.f32.mrf.mxu0
    %v794 = vadd.f32 %v661, %v793
    %v795 = vpop.f32.mrf.mxu0
    %v796 = vpop.f32.mrf.mxu0
    %v797 = vadd.f32 %v661, %v796
    %v798 = vpop.f32.mrf.mxu0
    %799 = vmatprep.mubr.bf16.mxu0 %v611
    %800 = vmatmul.mubr.bf16.gmra.mxu0 %v610
    %v801 = vpop.f32.mrf.mxu0
    %v802 = vadd.f32 %v661, %v801
    %v803 = vpop.f32.mrf.mxu0
    %v804 = vpop.f32.mrf.mxu0
    %v805 = vadd.f32 %v661, %v804
    %v806 = vpop.f32.mrf.mxu0
    %807 = vmatprep.mubr.bf16.mxu0 %v613
    %808 = vmatmul.mubr.bf16.gmra.mxu0 %v612
    %v809 = vpop.f32.mrf.mxu0
    %v810 = vadd.f32 %v661, %v809
    %v811 = vpop.f32.mrf.mxu0
    %v812 = vpop.f32.mrf.mxu0
    %v813 = vadd.f32 %v661, %v812
    %v814 = vpop.f32.mrf.mxu0
    %815 = vmatprep.mubr.bf16.mxu0 %v615
    %816 = vmatmul.mubr.bf16.gmra.mxu0 %v614
    %v817 = vpop.f32.mrf.mxu0
    %v818 = vadd.f32 %v661, %v817
    %v819 = vpop.f32.mrf.mxu0
    %v820 = vpop.f32.mrf.mxu0
    %v821 = vadd.f32 %v661, %v820
    %v822 = vpop.f32.mrf.mxu0
    %823 = vmatprep.mubr.bf16.mxu0 %v617
    %824 = vmatmul.mubr.bf16.gmra.mxu0 %v616
    %v825 = vpop.f32.mrf.mxu0
    %v826 = vadd.f32 %v661, %v825
    %v827 = vpop.f32.mrf.mxu0
    %v828 = vpop.f32.mrf.mxu0
    %v829 = vadd.f32 %v661, %v828
    %v830 = vpop.f32.mrf.mxu0
    %831 = vmatprep.mubr.bf16.mxu0 %v619
    %832 = vmatmul.mubr.bf16.gmra.mxu0 %v618
    %v833 = vpop.f32.mrf.mxu0
    %v834 = vadd.f32 %v661, %v833
    %v835 = vpop.f32.mrf.mxu0
    %v836 = vpop.f32.mrf.mxu0
    %v837 = vadd.f32 %v661, %v836
    %v838 = vpop.f32.mrf.mxu0
    %839 = vmatprep.mubr.bf16.mxu0 %v621
    %840 = vmatmul.mubr.bf16.gmra.mxu0 %v620
    %v841 = vpop.f32.mrf.mxu0
    %v842 = vadd.f32 %v661, %v841
    %v843 = vpop.f32.mrf.mxu0
    %v844 = vpop.f32.mrf.mxu0
    %v845 = vadd.f32 %v661, %v844
    %v846 = vpop.f32.mrf.mxu0
    %847 = vmatprep.mubr.bf16.mxu0 %v623
    %848 = vmatmul.mubr.bf16.gmra.mxu0 %v622
    %v849 = vpop.f32.mrf.mxu0
    %v850 = vadd.f32 %v661, %v849
    %v851 = vpop.f32.mrf.mxu0
    %v852 = vpop.f32.mrf.mxu0
    %v853 = vadd.f32 %v661, %v852
    %v854 = vpop.f32.mrf.mxu0
    %855 = vdwg.mxu0
    %v856 = vmax.f32 %v794, 0.0
    %v857 = vmax.f32 %v797, 0.0
    %v858 = vmax.f32 %v802, 0.0
    %v859 = vmax.f32 %v805, 0.0
    %v860 = vmax.f32 %v810, 0.0
    %v861 = vmax.f32 %v813, 0.0
    %v862 = vmax.f32 %v818, 0.0
    %v863 = vmax.f32 %v821, 0.0
    %v864 = vmax.f32 %v826, 0.0
    %v865 = vmax.f32 %v829, 0.0
    %v866 = vmax.f32 %v834, 0.0
    %v867 = vmax.f32 %v837, 0.0
    %v868 = vmax.f32 %v842, 0.0
    %v869 = vmax.f32 %v845, 0.0
    %v870 = vmax.f32 %v850, 0.0
    %v871 = vmax.f32 %v853, 0.0
    %v872 = vpack.c.bf16 %v857, %v856
    %v873 = vpack.c.bf16 %v859, %v858
    %v874 = vpack.c.bf16 %v861, %v860
    %v875 = vpack.c.bf16 %v863, %v862
    %v876 = vpack.c.bf16 %v865, %v864
    %v877 = vpack.c.bf16 %v867, %v866
    %v878 = vpack.c.bf16 %v869, %v868
    %v879 = vpack.c.bf16 %v871, %v870
    %v880 = vld [vmem:[%s6] sm:$0xf]
    %v881 = vld [vmem:[%s6 + $0x4] sm:$0xf]
    %v882 = vld [vmem:[%s6 + $0x8] sm:$0xf]
    %v883 = vld [vmem:[%s6 + $0xc] sm:$0xf]
    %v884 = vld [vmem:[%s6 + $0x10] sm:$0xf]
    %v885 = vld [vmem:[%s6 + $0x14] sm:$0xf]
    %v886 = vld [vmem:[%s6 + $0x18] sm:$0xf]
    %v887 = vld [vmem:[%s6 + $0x1c] sm:$0xf]
    %v888 = vld [vmem:[%s6 + $0x20] sm:$0xf]
    %v889 = vld [vmem:[%s6 + $0x24] sm:$0xf]
    %v890 = vld [vmem:[%s6 + $0x28] sm:$0xf]
    %v891 = vld [vmem:[%s6 + $0x2c] sm:$0xf]
    %v892 = vld [vmem:[%s6 + $0x30] sm:$0xf]
    %v893 = vld [vmem:[%s6 + $0x34] sm:$0xf]
    %v894 = vld [vmem:[%s6 + $0x38] sm:$0xf]
    %v895 = vld [vmem:[%s6 + $0x3c] sm:$0xf]
    %v896 = vld [vmem:[%s7] sm:$0x1]
    %v898 = vlaneseq
    %v899 = vshrl.u32 %v898, 7
    %v900 = vsub.s32 0, %v899
    %v901 = vrot.slane %v896, %v900
    %v919 = vunpack.c.l.b16 %v880
    %v920 = vunpack.c.l.b16 %v881
    %v921 = vunpack.c.l.b16 %v882
    %v922 = vunpack.c.l.b16 %v883
    %v923 = vunpack.c.l.b16 %v884
    %v924 = vunpack.c.l.b16 %v885
    %v925 = vunpack.c.l.b16 %v886
    %v926 = vunpack.c.l.b16 %v887
    %v927 = vunpack.c.l.b16 %v888
    %v928 = vunpack.c.l.b16 %v889
    %v929 = vunpack.c.l.b16 %v890
    %v930 = vunpack.c.l.b16 %v891
    %v931 = vunpack.c.l.b16 %v892
    %v932 = vunpack.c.l.b16 %v893
    %v933 = vunpack.c.l.b16 %v894
    %v934 = vunpack.c.l.b16 %v895
    %v935 = vpack.c.b16 %v920, %v919
    %v936 = vpack.c.b16 %v922, %v921
    %v937 = vpack.c.b16 %v924, %v923
    %v938 = vpack.c.b16 %v926, %v925
    %v939 = vpack.c.b16 %v928, %v927
    %v940 = vpack.c.b16 %v930, %v929
    %v941 = vpack.c.b16 %v932, %v931
    %v942 = vpack.c.b16 %v934, %v933
    %951 = vmatprep.subr.bf16.mxu0 0
    %952 = vmatpush1.bf16.msra.mxu0 %v942
    %953 = vmatprep.subr.bf16.mxu0 0
    %954 = vmatpush1.bf16.msra.mxu0 %v941
    %955 = vmatprep.subr.bf16.mxu0 0
    %956 = vmatpush1.bf16.msra.mxu0 %v940
    %957 = vmatprep.subr.bf16.mxu0 0
    %958 = vmatpush1.bf16.msra.mxu0 %v939
    %959 = vmatprep.subr.bf16.mxu0 0
    %960 = vmatpush1.bf16.msra.mxu0 %v938
    %961 = vmatprep.subr.bf16.mxu0 0
    %962 = vmatpush1.bf16.msra.mxu0 %v937
    %963 = vmatprep.subr.bf16.mxu0 0
    %964 = vmatpush1.bf16.msra.mxu0 %v936
    %965 = vmatprep.subr.bf16.mxu0 0
    %966 = vmatpush1.bf16.msra.mxu0 %v935
    %967 = vmatprep.subr.bf16.mxu0 0
    %968 = vmatpush2.bf16.msra.mxu0 0
    %969 = vmatprep.subr.bf16.mxu0 0
    %970 = vmatpush2.bf16.msra.mxu0 0
    %971 = vmatprep.subr.bf16.mxu0 0
    %972 = vmatpush2.bf16.msra.mxu0 0
    %973 = vmatprep.subr.bf16.mxu0 0
    %974 = vmatpush2.bf16.msra.mxu0 0
    %975 = vmatprep.subr.bf16.mxu0 0
    %976 = vmatpush2.bf16.msra.mxu0 0
    %977 = vmatprep.subr.bf16.mxu0 0
    %978 = vmatpush2.bf16.msra.mxu0 0
    %979 = vmatprep.subr.bf16.mxu0 0
    %980 = vmatpush2.bf16.msra.mxu0 0
    %981 = vmatprep.subr.bf16.mxu0 0
    %982 = vmatpush2.bf16.msra.mxu0 0
    %983 = vmatprep.mubr.bf16.mxu0 0
    %984 = vmatmul.mubr.bf16.gmra.mxu0 %v872
    %v985 = vpop.f32.mrf.mxu0
    %v986 = vadd.f32 %v901, %v985
    %v987 = vpop.f32.mrf.mxu0
    %v988 = vpop.f32.mrf.mxu0
    %v989 = vadd.f32 %v901, %v988
    %v990 = vpop.f32.mrf.mxu0
    %991 = vmatprep.mubr.bf16.mxu0 0
    %992 = vmatmul.mubr.bf16.gmra.mxu0 %v873
    %v993 = vpop.f32.mrf.mxu0
    %v994 = vadd.f32 %v901, %v993
    %v995 = vpop.f32.mrf.mxu0
    %v996 = vpop.f32.mrf.mxu0
    %v997 = vadd.f32 %v901, %v996
    %v998 = vpop.f32.mrf.mxu0
    %999 = vmatprep.mubr.bf16.mxu0 0
    %1000 = vmatmul.mubr.bf16.gmra.mxu0 %v874
    %v1001 = vpop.f32.mrf.mxu0
    %v1002 = vadd.f32 %v901, %v1001
    %v1003 = vpop.f32.mrf.mxu0
    %v1004 = vpop.f32.mrf.mxu0
    %v1005 = vadd.f32 %v901, %v1004
    %v1006 = vpop.f32.mrf.mxu0
    %1007 = vmatprep.mubr.bf16.mxu0 0
    %1008 = vmatmul.mubr.bf16.gmra.mxu0 %v875
    %v1009 = vpop.f32.mrf.mxu0
    %v1010 = vadd.f32 %v901, %v1009
    %v1011 = vpop.f32.mrf.mxu0
    %v1012 = vpop.f32.mrf.mxu0
    %v1013 = vadd.f32 %v901, %v1012
    %v1014 = vpop.f32.mrf.mxu0
    %1015 = vmatprep.mubr.bf16.mxu0 0
    %1016 = vmatmul.mubr.bf16.gmra.mxu0 %v876
    %v1017 = vpop.f32.mrf.mxu0
    %v1018 = vadd.f32 %v901, %v1017
    %v1019 = vpop.f32.mrf.mxu0
    %v1020 = vpop.f32.mrf.mxu0
    %v1021 = vadd.f32 %v901, %v1020
    %v1022 = vpop.f32.mrf.mxu0
    %1023 = vmatprep.mubr.bf16.mxu0 0
    %1024 = vmatmul.mubr.bf16.gmra.mxu0 %v877
    %v1025 = vpop.f32.mrf.mxu0
    %v1026 = vadd.f32 %v901, %v1025
    %v1027 = vpop.f32.mrf.mxu0
    %v1028 = vpop.f32.mrf.mxu0
    %v1029 = vadd.f32 %v901, %v1028
    %v1030 = vpop.f32.mrf.mxu0
    %1031 = vmatprep.mubr.bf16.mxu0 0
    %1032 = vmatmul.mubr.bf16.gmra.mxu0 %v878
    %v1033 = vpop.f32.mrf.mxu0
    %v1034 = vadd.f32 %v901, %v1033
    %v1035 = vpop.f32.mrf.mxu0
    %v1036 = vpop.f32.mrf.mxu0
    %v1037 = vadd.f32 %v901, %v1036
    %v1038 = vpop.f32.mrf.mxu0
    %1039 = vmatprep.mubr.bf16.mxu0 0
    %1040 = vmatmul.mubr.bf16.gmra.mxu0 %v879
    %v1041 = vpop.f32.mrf.mxu0
    %v1042 = vadd.f32 %v901, %v1041
    %v1043 = vpop.f32.mrf.mxu0
    %v1044 = vpop.f32.mrf.mxu0
    %v1045 = vadd.f32 %v901, %v1044
    %v1046 = vpop.f32.mrf.mxu0
    %1047 = vdwg.mxu0
    %v1048 = vmax.f32 %v986, 0.0
    %v1049 = vmax.f32 %v989, 0.0
    %v1050 = vmax.f32 %v994, 0.0
    %v1051 = vmax.f32 %v997, 0.0
    %v1052 = vmax.f32 %v1002, 0.0
    %v1053 = vmax.f32 %v1005, 0.0
    %v1054 = vmax.f32 %v1010, 0.0
    %v1055 = vmax.f32 %v1013, 0.0
    %v1056 = vmax.f32 %v1018, 0.0
    %v1057 = vmax.f32 %v1021, 0.0
    %v1058 = vmax.f32 %v1026, 0.0
    %v1059 = vmax.f32 %v1029, 0.0
    %v1060 = vmax.f32 %v1034, 0.0
    %v1061 = vmax.f32 %v1037, 0.0
    %v1062 = vmax.f32 %v1042, 0.0
    %v1063 = vmax.f32 %v1045, 0.0
    %v1064 = vpack.c.bf16 %v1049, %v1048
    %v1065 = vpack.c.bf16 %v1051, %v1050
    %v1066 = vpack.c.bf16 %v1053, %v1052
    %v1067 = vpack.c.bf16 %v1055, %v1054
    %v1068 = vpack.c.bf16 %v1057, %v1056
    %v1069 = vpack.c.bf16 %v1059, %v1058
    %v1070 = vpack.c.bf16 %v1061, %v1060
    %v1071 = vpack.c.bf16 %v1063, %v1062
    %v1072 = vld [vmem:[#allocation2] sm:$0xf]
    %v1073 = vld [vmem:[#allocation2 + $0x4] sm:$0xf]
    %v1074 = vld [vmem:[#allocation2 + $0x8] sm:$0xf]
    %v1075 = vld [vmem:[#allocation2 + $0xc] sm:$0xf]
    %v1076 = vld [vmem:[#allocation2 + $0x10] sm:$0xf]
    %v1077 = vld [vmem:[#allocation2 + $0x14] sm:$0xf]
    %v1078 = vld [vmem:[#allocation2 + $0x18] sm:$0xf]
    %v1079 = vld [vmem:[#allocation2 + $0x1c] sm:$0xf]
    %v1080 = vld [vmem:[#allocation4] sm:$0x1]
    %v1082 = vlaneseq
    %v1083 = vshrl.u32 %v1082, 7
    %v1084 = vsub.s32 0, %v1083
    %v1085 = vrot.slane %v1080, %v1084
    %v1095 = vunpack.c.l.b16 %v1072
    %v1096 = vunpack.c.l.b16 %v1073
    %v1097 = vunpack.c.l.b16 %v1074
    %v1098 = vunpack.c.l.b16 %v1075
    %v1099 = vunpack.c.l.b16 %v1076
    %v1100 = vunpack.c.l.b16 %v1077
    %v1101 = vunpack.c.l.b16 %v1078
    %v1102 = vunpack.c.l.b16 %v1079
    %v1103 = vpack.c.b16 %v1096, %v1095
    %v1104 = vpack.c.b16 %v1098, %v1097
    %v1105 = vpack.c.b16 %v1100, %v1099
    %v1106 = vpack.c.b16 %v1102, %v1101
    %vm1111 = vcmask 523264
    %v1113 = vsel %vm1111, %v1064, 0
    %v1116 = vsel %vm1111, %v1065, 0
    %v1119 = vsel %vm1111, %v1066, 0
    %v1122 = vsel %vm1111, %v1067, 0
    %v1125 = vsel %vm1111, %v1068, 0
    %v1128 = vsel %vm1111, %v1069, 0
    %v1131 = vsel %vm1111, %v1070, 0
    %v1134 = vsel %vm1111, %v1071, 0
    %1136 = vmatprep.subr.bf16.mxu0 0
    %1137 = vmatpush1.bf16.msra.mxu0 0
    %1138 = vmatprep.subr.bf16.mxu0 0
    %1139 = vmatpush1.bf16.msra.mxu0 0
    %1140 = vmatprep.subr.bf16.mxu0 0
    %1141 = vmatpush1.bf16.msra.mxu0 0
    %1142 = vmatprep.subr.bf16.mxu0 0
    %1143 = vmatpush1.bf16.msra.mxu0 0
    %1144 = vmatprep.subr.bf16.mxu0 0
    %1145 = vmatpush1.bf16.msra.mxu0 %v1106
    %1146 = vmatprep.subr.bf16.mxu0 0
    %1147 = vmatpush1.bf16.msra.mxu0 %v1105
    %1148 = vmatprep.subr.bf16.mxu0 0
    %1149 = vmatpush1.bf16.msra.mxu0 %v1104
    %1150 = vmatprep.subr.bf16.mxu0 0
    %1151 = vmatpush1.bf16.msra.mxu0 %v1103
    %1152 = vmatprep.subr.bf16.mxu0 0
    %1153 = vmatpush2.bf16.msra.mxu0 0
    %1154 = vmatprep.subr.bf16.mxu0 0
    %1155 = vmatpush2.bf16.msra.mxu0 0
    %1156 = vmatprep.subr.bf16.mxu0 0
    %1157 = vmatpush2.bf16.msra.mxu0 0
    %1158 = vmatprep.subr.bf16.mxu0 0
    %1159 = vmatpush2.bf16.msra.mxu0 0
    %1160 = vmatprep.subr.bf16.mxu0 0
    %1161 = vmatpush2.bf16.msra.mxu0 0
    %1162 = vmatprep.subr.bf16.mxu0 0
    %1163 = vmatpush2.bf16.msra.mxu0 0
    %1164 = vmatprep.subr.bf16.mxu0 0
    %1165 = vmatpush2.bf16.msra.mxu0 0
    %1166 = vmatprep.subr.bf16.mxu0 0
    %1167 = vmatpush2.bf16.msra.mxu0 0
    %1168 = vmatprep.mubr.bf16.mxu0 0
    %1169 = vmatmul.mubr.bf16.gmra.mxu0 %v1113
    %v1170 = vpop.f32.mrf.mxu0
    %v1171 = vadd.f32 %v1085, %v1170
    %v1172 = vpop.f32.mrf.mxu0
    %v1173 = vpop.f32.mrf.mxu0
    %v1174 = vadd.f32 %v1085, %v1173
    %v1175 = vpop.f32.mrf.mxu0
    %1176 = vmatprep.mubr.bf16.mxu0 0
    %1177 = vmatmul.mubr.bf16.gmra.mxu0 %v1116
    %v1178 = vpop.f32.mrf.mxu0
    %v1179 = vadd.f32 %v1085, %v1178
    %v1180 = vpop.f32.mrf.mxu0
    %v1181 = vpop.f32.mrf.mxu0
    %v1182 = vadd.f32 %v1085, %v1181
    %v1183 = vpop.f32.mrf.mxu0
    %1184 = vmatprep.mubr.bf16.mxu0 0
    %1185 = vmatmul.mubr.bf16.gmra.mxu0 %v1119
    %v1186 = vpop.f32.mrf.mxu0
    %v1187 = vadd.f32 %v1085, %v1186
    %v1188 = vpop.f32.mrf.mxu0
    %v1189 = vpop.f32.mrf.mxu0
    %v1190 = vadd.f32 %v1085, %v1189
    %v1191 = vpop.f32.mrf.mxu0
    %1192 = vmatprep.mubr.bf16.mxu0 0
    %1193 = vmatmul.mubr.bf16.gmra.mxu0 %v1122
    %v1194 = vpop.f32.mrf.mxu0
    %v1195 = vadd.f32 %v1085, %v1194
    %v1196 = vpop.f32.mrf.mxu0
    %v1197 = vpop.f32.mrf.mxu0
    %v1198 = vadd.f32 %v1085, %v1197
    %v1199 = vpop.f32.mrf.mxu0
    %1200 = vmatprep.mubr.bf16.mxu0 0
    %1201 = vmatmul.mubr.bf16.gmra.mxu0 %v1125
    %v1202 = vpop.f32.mrf.mxu0
    %v1203 = vadd.f32 %v1085, %v1202
    %v1204 = vpop.f32.mrf.mxu0
    %v1205 = vpop.f32.mrf.mxu0
    %v1206 = vadd.f32 %v1085, %v1205
    %v1207 = vpop.f32.mrf.mxu0
    %1208 = vmatprep.mubr.bf16.mxu0 0
    %1209 = vmatmul.mubr.bf16.gmra.mxu0 %v1128
    %v1210 = vpop.f32.mrf.mxu0
    %v1211 = vadd.f32 %v1085, %v1210
    %v1212 = vpop.f32.mrf.mxu0
    %v1213 = vpop.f32.mrf.mxu0
    %v1214 = vadd.f32 %v1085, %v1213
    %v1215 = vpop.f32.mrf.mxu0
    %1216 = vmatprep.mubr.bf16.mxu0 0
    %1217 = vmatmul.mubr.bf16.gmra.mxu0 %v1131
    %v1218 = vpop.f32.mrf.mxu0
    %v1219 = vadd.f32 %v1085, %v1218
    %v1220 = vpop.f32.mrf.mxu0
    %v1221 = vpop.f32.mrf.mxu0
    %v1222 = vadd.f32 %v1085, %v1221
    %v1223 = vpop.f32.mrf.mxu0
    %1224 = vmatprep.mubr.bf16.mxu0 0
    %1225 = vmatmul.mubr.bf16.gmra.mxu0 %v1134
    %v1226 = vpop.f32.mrf.mxu0
    %v1227 = vadd.f32 %v1085, %v1226
    %v1228 = vpop.f32.mrf.mxu0
    %v1229 = vpop.f32.mrf.mxu0
    %v1230 = vadd.f32 %v1085, %v1229
    %v1231 = vpop.f32.mrf.mxu0
    %1232 = vdwg.mxu0
    %1233 = vst [vmem:[%s19] sm:$0xff] %v1171
    %1234 = vst [vmem:[%s19 + $0x8] sm:$0xff] %v1174
    %1235 = vst [vmem:[%s19 + $0x10] sm:$0xff] %v1179
    %1236 = vst [vmem:[%s19 + $0x18] sm:$0xff] %v1182
    %1237 = vst [vmem:[%s19 + $0x20] sm:$0xff] %v1187
    %1238 = vst [vmem:[%s19 + $0x28] sm:$0xff] %v1190
    %1239 = vst [vmem:[%s19 + $0x30] sm:$0xff] %v1195
    %1240 = vst [vmem:[%s19 + $0x38] sm:$0xff] %v1198
    %1241 = vst [vmem:[%s19 + $0x40] sm:$0xff] %v1203
    %1242 = vst [vmem:[%s19 + $0x48] sm:$0xff] %v1206
    %1243 = vst [vmem:[%s19 + $0x50] sm:$0xff] %v1211
    %1244 = vst [vmem:[%s19 + $0x58] sm:$0xff] %v1214
    %1245 = vst [vmem:[%s19 + $0x60] sm:$0xff] %v1219
    %1246 = vst [vmem:[%s19 + $0x68] sm:$0xff] %v1222
    %1247 = vst [vmem:[%s19 + $0x70] sm:$0xff] %v1227
    %1248 = vst [vmem:[%s19 + $0x78] sm:$0xff] %v1230
    %v1249 = vld [vmem:[%s1] sm:$0xff]
    %v1250 = vld [vmem:[%s1 + $0x8] sm:$0xff]
    %v1251 = vld [vmem:[%s1 + $0x10] sm:$0xff]
    %v1252 = vld [vmem:[%s1 + $0x18] sm:$0xff]
    %v1253 = vld [vmem:[%s1 + $0x20] sm:$0xff]
    %v1254 = vld [vmem:[%s1 + $0x28] sm:$0xff]
    %v1255 = vld [vmem:[%s1 + $0x30] sm:$0xff]
    %v1256 = vld [vmem:[%s1 + $0x38] sm:$0xff]
    %v1257 = vld [vmem:[%s1 + $0x40] sm:$0xff]
    %v1258 = vld [vmem:[%s1 + $0x48] sm:$0xff]
    %v1259 = vld [vmem:[%s1 + $0x50] sm:$0xff]
    %v1260 = vld [vmem:[%s1 + $0x58] sm:$0xff]
    %v1261 = vld [vmem:[%s1 + $0x60] sm:$0xff]
    %v1262 = vld [vmem:[%s1 + $0x68] sm:$0xff]
    %v1263 = vld [vmem:[%s1 + $0x70] sm:$0xff]
    %v1264 = vld [vmem:[%s1 + $0x78] sm:$0xff]
    %v1265 = vmul.f32 %v1171, 0.5
    %v1266 = vmul.f32 %v1174, 0.5
    %v1267 = vmul.f32 %v1179, 0.5
    %v1268 = vmul.f32 %v1182, 0.5
    %v1269 = vmul.f32 %v1187, 0.5
    %v1270 = vmul.f32 %v1190, 0.5
    %v1271 = vmul.f32 %v1195, 0.5
    %v1272 = vmul.f32 %v1198, 0.5
    %v1273 = vmul.f32 %v1203, 0.5
    %v1274 = vmul.f32 %v1206, 0.5
    %v1275 = vmul.f32 %v1211, 0.5
    %v1276 = vmul.f32 %v1214, 0.5
    %v1277 = vmul.f32 %v1219, 0.5
    %v1278 = vmul.f32 %v1222, 0.5
    %v1279 = vmul.f32 %v1227, 0.5
    %v1280 = vmul.f32 %v1230, 0.5
    %v1281 = vmul.f32 %v1265, 1.442695
    %v1282 = vpow.pop %v1281
    %v1283 = vmul.f32 %v1266, 1.442695
    %v1284 = vpow.pop %v1283
    %v1285 = vmul.f32 %v1267, 1.442695
    %v1286 = vpow.pop %v1285
    %v1287 = vmul.f32 %v1268, 1.442695
    %v1288 = vpow.pop %v1287
    %v1289 = vmul.f32 %v1269, 1.442695
    %v1290 = vpow.pop %v1289
    %v1291 = vmul.f32 %v1270, 1.442695
    %v1292 = vpow.pop %v1291
    %v1293 = vmul.f32 %v1271, 1.442695
    %v1294 = vpow.pop %v1293
    %v1295 = vmul.f32 %v1272, 1.442695
    %v1296 = vpow.pop %v1295
    %v1297 = vmul.f32 %v1273, 1.442695
    %v1298 = vpow.pop %v1297
    %v1299 = vmul.f32 %v1274, 1.442695
    %v1300 = vpow.pop %v1299
    %v1301 = vmul.f32 %v1275, 1.442695
    %v1302 = vpow.pop %v1301
    %v1303 = vmul.f32 %v1276, 1.442695
    %v1304 = vpow.pop %v1303
    %v1305 = vmul.f32 %v1277, 1.442695
    %v1306 = vpow.pop %v1305
    %v1307 = vmul.f32 %v1278, 1.442695
    %v1308 = vpow.pop %v1307
    %v1309 = vmul.f32 %v1279, 1.442695
    %v1310 = vpow.pop %v1309
    %v1311 = vmul.f32 %v1280, 1.442695
    %v1312 = vpow.pop %v1311
    %1329 = vrot.lane.b32.xlu0 %v1282, 96
    %v1330 = vpop.permute.xlu0 %1329
    %1331 = vrot.lane.b32.xlu0 %v1284, 96
    %v1332 = vpop.permute.xlu0 %1331
    %1333 = vrot.lane.b32.xlu0 %v1286, 96
    %v1334 = vpop.permute.xlu0 %1333
    %1335 = vrot.lane.b32.xlu0 %v1288, 96
    %v1336 = vpop.permute.xlu0 %1335
    %1337 = vrot.lane.b32.xlu0 %v1290, 96
    %v1338 = vpop.permute.xlu0 %1337
    %1339 = vrot.lane.b32.xlu0 %v1292, 96
    %v1340 = vpop.permute.xlu0 %1339
    %1341 = vrot.lane.b32.xlu0 %v1294, 96
    %v1342 = vpop.permute.xlu0 %1341
    %1343 = vrot.lane.b32.xlu0 %v1296, 96
    %v1344 = vpop.permute.xlu0 %1343
    %1345 = vrot.lane.b32.xlu0 %v1298, 96
    %v1346 = vpop.permute.xlu0 %1345
    %1347 = vrot.lane.b32.xlu0 %v1300, 96
    %v1348 = vpop.permute.xlu0 %1347
    %1349 = vrot.lane.b32.xlu0 %v1302, 96
    %v1350 = vpop.permute.xlu0 %1349
    %1351 = vrot.lane.b32.xlu0 %v1304, 96
    %v1352 = vpop.permute.xlu0 %1351
    %1353 = vrot.lane.b32.xlu0 %v1306, 96
    %v1354 = vpop.permute.xlu0 %1353
    %1355 = vrot.lane.b32.xlu0 %v1308, 96
    %v1356 = vpop.permute.xlu0 %1355
    %1357 = vrot.lane.b32.xlu0 %v1310, 96
    %v1358 = vpop.permute.xlu0 %1357
    %1359 = vrot.lane.b32.xlu0 %v1312, 96
    %v1360 = vpop.permute.xlu0 %1359
    %v1377 = vmul.f32 %v1249, %v1330
    %v1378 = vmul.f32 %v1250, %v1332
    %v1379 = vmul.f32 %v1251, %v1334
    %v1380 = vmul.f32 %v1252, %v1336
    %v1381 = vmul.f32 %v1253, %v1338
    %v1382 = vmul.f32 %v1254, %v1340
    %v1383 = vmul.f32 %v1255, %v1342
    %v1384 = vmul.f32 %v1256, %v1344
    %v1385 = vmul.f32 %v1257, %v1346
    %v1386 = vmul.f32 %v1258, %v1348
    %v1387 = vmul.f32 %v1259, %v1350
    %v1388 = vmul.f32 %v1260, %v1352
    %v1389 = vmul.f32 %v1261, %v1354
    %v1390 = vmul.f32 %v1262, %v1356
    %v1391 = vmul.f32 %v1263, %v1358
    %v1392 = vmul.f32 %v1264, %v1360
    %v1393 = vadd.f32 %v1171, %v1377
    %v1394 = vadd.f32 %v1174, %v1378
    %v1395 = vadd.f32 %v1179, %v1379
    %v1396 = vadd.f32 %v1182, %v1380
    %v1397 = vadd.f32 %v1187, %v1381
    %v1398 = vadd.f32 %v1190, %v1382
    %v1399 = vadd.f32 %v1195, %v1383
    %v1400 = vadd.f32 %v1198, %v1384
    %v1401 = vadd.f32 %v1203, %v1385
    %v1402 = vadd.f32 %v1206, %v1386
    %v1403 = vadd.f32 %v1211, %v1387
    %v1404 = vadd.f32 %v1214, %v1388
    %v1405 = vadd.f32 %v1219, %v1389
    %v1406 = vadd.f32 %v1222, %v1390
    %v1407 = vadd.f32 %v1227, %v1391
    %v1408 = vadd.f32 %v1230, %v1392
    %v1409 = vpack.c.bf16 %v1394, %v1393
    %v1410 = vpack.c.bf16 %v1396, %v1395
    %v1411 = vpack.c.bf16 %v1398, %v1397
    %v1412 = vpack.c.bf16 %v1400, %v1399
    %v1413 = vpack.c.bf16 %v1402, %v1401
    %v1414 = vpack.c.bf16 %v1404, %v1403
    %v1415 = vpack.c.bf16 %v1406, %v1405
    %v1416 = vpack.c.bf16 %v1408, %v1407
    %v1417 = vld [vmem:[%s10] sm:$0xf]
    %v1418 = vld [vmem:[%s10 + $0x4] sm:$0xf]
    %v1419 = vld [vmem:[%s10 + $0x8] sm:$0xf]
    %v1420 = vld [vmem:[%s10 + $0xc] sm:$0xf]
    %v1421 = vld [vmem:[#allocation6] sm:$0x1]
    %v1423 = vlaneseq
    %v1424 = vshrl.u32 %v1423, 7
    %v1425 = vsub.s32 0, %v1424
    %v1426 = vrot.slane %v1421, %v1425
    %v1432 = vunpack.c.l.b16 %v1417
    %v1433 = vunpack.c.l.b16 %v1418
    %v1434 = vunpack.c.l.b16 %v1419
    %v1435 = vunpack.c.l.b16 %v1420
    %v1436 = vpack.c.b16 %v1433, %v1432
    %v1437 = vpack.c.b16 %v1435, %v1434
    %vm1440 = vcmask 261120
    %v1442 = vsel %vm1440, %v1409, 0
    %v1445 = vsel %vm1440, %v1410, 0
    %v1448 = vsel %vm1440, %v1411, 0
    %v1451 = vsel %vm1440, %v1412, 0
    %v1454 = vsel %vm1440, %v1413, 0
    %v1457 = vsel %vm1440, %v1414, 0
    %v1460 = vsel %vm1440, %v1415, 0
    %v1463 = vsel %vm1440, %v1416, 0
    %1465 = vmatprep.subr.bf16.mxu0 0
    %1466 = vmatpush1.bf16.msra.mxu0 0
    %1467 = vmatprep.subr.bf16.mxu0 0
    %1468 = vmatpush1.bf16.msra.mxu0 0
    %1469 = vmatprep.subr.bf16.mxu0 0
    %1470 = vmatpush1.bf16.msra.mxu0 0
    %1471 = vmatprep.subr.bf16.mxu0 0
    %1472 = vmatpush1.bf16.msra.mxu0 0
    %1473 = vmatprep.subr.bf16.mxu0 0
    %1474 = vmatpush1.bf16.msra.mxu0 0
    %1475 = vmatprep.subr.bf16.mxu0 0
    %1476 = vmatpush1.bf16.msra.mxu0 0
    %1477 = vmatprep.subr.bf16.mxu0 0
    %1478 = vmatpush1.bf16.msra.mxu0 %v1437
    %1479 = vmatprep.subr.bf16.mxu0 0
    %1480 = vmatpush1.bf16.msra.mxu0 %v1436
    %1481 = vmatprep.subr.bf16.mxu0 0
    %1482 = vmatpush2.bf16.msra.mxu0 0
    %1483 = vmatprep.subr.bf16.mxu0 0
    %1484 = vmatpush2.bf16.msra.mxu0 0
    %1485 = vmatprep.subr.bf16.mxu0 0
    %1486 = vmatpush2.bf16.msra.mxu0 0
    %1487 = vmatprep.subr.bf16.mxu0 0
    %1488 = vmatpush2.bf16.msra.mxu0 0
    %1489 = vmatprep.subr.bf16.mxu0 0
    %1490 = vmatpush2.bf16.msra.mxu0 0
    %1491 = vmatprep.subr.bf16.mxu0 0
    %1492 = vmatpush2.bf16.msra.mxu0 0
    %1493 = vmatprep.subr.bf16.mxu0 0
    %1494 = vmatpush2.bf16.msra.mxu0 0
    %1495 = vmatprep.subr.bf16.mxu0 0
    %1496 = vmatpush2.bf16.msra.mxu0 0
    %1497 = vmatprep.mubr.bf16.mxu0 0
    %1498 = vmatmul.mubr.bf16.gmra.mxu0 %v1442
    %v1499 = vpop.f32.mrf.mxu0
    %v1500 = vadd.f32 %v1426, %v1499
    %v1501 = vpop.f32.mrf.mxu0
    %v1502 = vpop.f32.mrf.mxu0
    %v1503 = vadd.f32 %v1426, %v1502
    %v1504 = vpop.f32.mrf.mxu0
    %1505 = vmatprep.mubr.bf16.mxu0 0
    %1506 = vmatmul.mubr.bf16.gmra.mxu0 %v1445
    %v1507 = vpop.f32.mrf.mxu0
    %v1508 = vadd.f32 %v1426, %v1507
    %v1509 = vpop.f32.mrf.mxu0
    %v1510 = vpop.f32.mrf.mxu0
    %v1511 = vadd.f32 %v1426, %v1510
    %v1512 = vpop.f32.mrf.mxu0
    %1513 = vmatprep.mubr.bf16.mxu0 0
    %1514 = vmatmul.mubr.bf16.gmra.mxu0 %v1448
    %v1515 = vpop.f32.mrf.mxu0
    %v1516 = vadd.f32 %v1426, %v1515
    %v1517 = vpop.f32.mrf.mxu0
    %v1518 = vpop.f32.mrf.mxu0
    %v1519 = vadd.f32 %v1426, %v1518
    %v1520 = vpop.f32.mrf.mxu0
    %1521 = vmatprep.mubr.bf16.mxu0 0
    %1522 = vmatmul.mubr.bf16.gmra.mxu0 %v1451
    %v1523 = vpop.f32.mrf.mxu0
    %v1524 = vadd.f32 %v1426, %v1523
    %v1525 = vpop.f32.mrf.mxu0
    %v1526 = vpop.f32.mrf.mxu0
    %v1527 = vadd.f32 %v1426, %v1526
    %v1528 = vpop.f32.mrf.mxu0
    %1529 = vmatprep.mubr.bf16.mxu0 0
    %1530 = vmatmul.mubr.bf16.gmra.mxu0 %v1454
    %v1531 = vpop.f32.mrf.mxu0
    %v1532 = vadd.f32 %v1426, %v1531
    %v1533 = vpop.f32.mrf.mxu0
    %v1534 = vpop.f32.mrf.mxu0
    %v1535 = vadd.f32 %v1426, %v1534
    %v1536 = vpop.f32.mrf.mxu0
    %1537 = vmatprep.mubr.bf16.mxu0 0
    %1538 = vmatmul.mubr.bf16.gmra.mxu0 %v1457
    %v1539 = vpop.f32.mrf.mxu0
    %v1540 = vadd.f32 %v1426, %v1539
    %v1541 = vpop.f32.mrf.mxu0
    %v1542 = vpop.f32.mrf.mxu0
    %v1543 = vadd.f32 %v1426, %v1542
    %v1544 = vpop.f32.mrf.mxu0
    %1545 = vmatprep.mubr.bf16.mxu0 0
    %1546 = vmatmul.mubr.bf16.gmra.mxu0 %v1460
    %v1547 = vpop.f32.mrf.mxu0
    %v1548 = vadd.f32 %v1426, %v1547
    %v1549 = vpop.f32.mrf.mxu0
    %v1550 = vpop.f32.mrf.mxu0
    %v1551 = vadd.f32 %v1426, %v1550
    %v1552 = vpop.f32.mrf.mxu0
    %1553 = vmatprep.mubr.bf16.mxu0 0
    %1554 = vmatmul.mubr.bf16.gmra.mxu0 %v1463
    %v1555 = vpop.f32.mrf.mxu0
    %v1556 = vadd.f32 %v1426, %v1555
    %v1557 = vpop.f32.mrf.mxu0
    %v1558 = vpop.f32.mrf.mxu0
    %v1559 = vadd.f32 %v1426, %v1558
    %v1560 = vpop.f32.mrf.mxu0
    %1561 = vdwg.mxu0
    %v1562 = vpack.c.bf16 %v1503, %v1500
    %v1563 = vpack.c.bf16 %v1511, %v1508
    %v1564 = vpack.c.bf16 %v1519, %v1516
    %v1565 = vpack.c.bf16 %v1527, %v1524
    %v1566 = vpack.c.bf16 %v1535, %v1532
    %v1567 = vpack.c.bf16 %v1543, %v1540
    %v1568 = vpack.c.bf16 %v1551, %v1548
    %v1569 = vpack.c.bf16 %v1559, %v1556
    %v1570 = vld [vmem:[#allocation7] sm:$0xf]
    %v1571 = vld [vmem:[#allocation7 + $0x4] sm:$0xf]
    %v1572 = vld [vmem:[#allocation7 + $0x8] sm:$0xf]
    %v1573 = vld [vmem:[#allocation7 + $0xc] sm:$0xf]
    %v1574 = vld [vmem:[#allocation7 + $0x10] sm:$0xf]
    %v1575 = vld [vmem:[#allocation7 + $0x14] sm:$0xf]
    %v1576 = vld [vmem:[#allocation7 + $0x18] sm:$0xf]
    %v1577 = vld [vmem:[#allocation7 + $0x1c] sm:$0xf]
    %v1578 = vld [vmem:[#allocation9] sm:$0x1]
    %v1580 = vlaneseq
    %v1581 = vshrl.u32 %v1580, 7
    %v1582 = vsub.s32 0, %v1581
    %v1583 = vrot.slane %v1578, %v1582
    %v1593 = vunpack.c.l.b16 %v1570
    %v1594 = vunpack.c.l.b16 %v1571
    %v1595 = vunpack.c.l.b16 %v1572
    %v1596 = vunpack.c.l.b16 %v1573
    %v1597 = vunpack.c.l.b16 %v1574
    %v1598 = vunpack.c.l.b16 %v1575
    %v1599 = vunpack.c.l.b16 %v1576
    %v1600 = vunpack.c.l.b16 %v1577
    %v1601 = vpack.c.b16 %v1594, %v1593
    %v1602 = vpack.c.b16 %v1596, %v1595
    %v1603 = vpack.c.b16 %v1598, %v1597
    %v1604 = vpack.c.b16 %v1600, %v1599
    %v1610 = vsel %vm1111, %v1562, 0
    %v1613 = vsel %vm1111, %v1563, 0
    %v1616 = vsel %vm1111, %v1564, 0
    %v1619 = vsel %vm1111, %v1565, 0
    %v1622 = vsel %vm1111, %v1566, 0
    %v1625 = vsel %vm1111, %v1567, 0
    %v1628 = vsel %vm1111, %v1568, 0
    %v1631 = vsel %vm1111, %v1569, 0
    %1633 = vmatprep.subr.bf16.mxu0 0
    %1634 = vmatpush1.bf16.msra.mxu0 0
    %1635 = vmatprep.subr.bf16.mxu0 0
    %1636 = vmatpush1.bf16.msra.mxu0 0
    %1637 = vmatprep.subr.bf16.mxu0 0
    %1638 = vmatpush1.bf16.msra.mxu0 0
    %1639 = vmatprep.subr.bf16.mxu0 0
    %1640 = vmatpush1.bf16.msra.mxu0 0
    %1641 = vmatprep.subr.bf16.mxu0 0
    %1642 = vmatpush1.bf16.msra.mxu0 %v1604
    %1643 = vmatprep.subr.bf16.mxu0 0
    %1644 = vmatpush1.bf16.msra.mxu0 %v1603
    %1645 = vmatprep.subr.bf16.mxu0 0
    %1646 = vmatpush1.bf16.msra.mxu0 %v1602
    %1647 = vmatprep.subr.bf16.mxu0 0
    %1648 = vmatpush1.bf16.msra.mxu0 %v1601
    %1649 = vmatprep.subr.bf16.mxu0 0
    %1650 = vmatpush2.bf16.msra.mxu0 0
    %1651 = vmatprep.subr.bf16.mxu0 0
    %1652 = vmatpush2.bf16.msra.mxu0 0
    %1653 = vmatprep.subr.bf16.mxu0 0
    %1654 = vmatpush2.bf16.msra.mxu0 0
    %1655 = vmatprep.subr.bf16.mxu0 0
    %1656 = vmatpush2.bf16.msra.mxu0 0
    %1657 = vmatprep.subr.bf16.mxu0 0
    %1658 = vmatpush2.bf16.msra.mxu0 0
    %1659 = vmatprep.subr.bf16.mxu0 0
    %1660 = vmatpush2.bf16.msra.mxu0 0
    %1661 = vmatprep.subr.bf16.mxu0 0
    %1662 = vmatpush2.bf16.msra.mxu0 0
    %1663 = vmatprep.subr.bf16.mxu0 0
    %1664 = vmatpush2.bf16.msra.mxu0 0
    %1665 = vmatprep.mubr.bf16.mxu0 0
    %1666 = vmatmul.mubr.bf16.gmra.mxu0 %v1610
    %v1667 = vpop.f32.mrf.mxu0
    %v1668 = vadd.f32 %v1583, %v1667
    %v1669 = vpop.f32.mrf.mxu0
    %v1670 = vpop.f32.mrf.mxu0
    %v1671 = vadd.f32 %v1583, %v1670
    %v1672 = vpop.f32.mrf.mxu0
    %1673 = vmatprep.mubr.bf16.mxu0 0
    %1674 = vmatmul.mubr.bf16.gmra.mxu0 %v1613
    %v1675 = vpop.f32.mrf.mxu0
    %v1676 = vadd.f32 %v1583, %v1675
    %v1677 = vpop.f32.mrf.mxu0
    %v1678 = vpop.f32.mrf.mxu0
    %v1679 = vadd.f32 %v1583, %v1678
    %v1680 = vpop.f32.mrf.mxu0
    %1681 = vmatprep.mubr.bf16.mxu0 0
    %1682 = vmatmul.mubr.bf16.gmra.mxu0 %v1616
    %v1683 = vpop.f32.mrf.mxu0
    %v1684 = vadd.f32 %v1583, %v1683
    %v1685 = vpop.f32.mrf.mxu0
    %v1686 = vpop.f32.mrf.mxu0
    %v1687 = vadd.f32 %v1583, %v1686
    %v1688 = vpop.f32.mrf.mxu0
    %1689 = vmatprep.mubr.bf16.mxu0 0
    %1690 = vmatmul.mubr.bf16.gmra.mxu0 %v1619
    %v1691 = vpop.f32.mrf.mxu0
    %v1692 = vadd.f32 %v1583, %v1691
    %v1693 = vpop.f32.mrf.mxu0
    %v1694 = vpop.f32.mrf.mxu0
    %v1695 = vadd.f32 %v1583, %v1694
    %v1696 = vpop.f32.mrf.mxu0
    %1697 = vmatprep.mubr.bf16.mxu0 0
    %1698 = vmatmul.mubr.bf16.gmra.mxu0 %v1622
    %v1699 = vpop.f32.mrf.mxu0
    %v1700 = vadd.f32 %v1583, %v1699
    %v1701 = vpop.f32.mrf.mxu0
    %v1702 = vpop.f32.mrf.mxu0
    %v1703 = vadd.f32 %v1583, %v1702
    %v1704 = vpop.f32.mrf.mxu0
    %1705 = vmatprep.mubr.bf16.mxu0 0
    %1706 = vmatmul.mubr.bf16.gmra.mxu0 %v1625
    %v1707 = vpop.f32.mrf.mxu0
    %v1708 = vadd.f32 %v1583, %v1707
    %v1709 = vpop.f32.mrf.mxu0
    %v1710 = vpop.f32.mrf.mxu0
    %v1711 = vadd.f32 %v1583, %v1710
    %v1712 = vpop.f32.mrf.mxu0
    %1713 = vmatprep.mubr.bf16.mxu0 0
    %1714 = vmatmul.mubr.bf16.gmra.mxu0 %v1628
    %v1715 = vpop.f32.mrf.mxu0
    %v1716 = vadd.f32 %v1583, %v1715
    %v1717 = vpop.f32.mrf.mxu0
    %v1718 = vpop.f32.mrf.mxu0
    %v1719 = vadd.f32 %v1583, %v1718
    %v1720 = vpop.f32.mrf.mxu0
    %1721 = vmatprep.mubr.bf16.mxu0 0
    %1722 = vmatmul.mubr.bf16.gmra.mxu0 %v1631
    %v1723 = vpop.f32.mrf.mxu0
    %v1724 = vadd.f32 %v1583, %v1723
    %v1725 = vpop.f32.mrf.mxu0
    %v1726 = vpop.f32.mrf.mxu0
    %v1727 = vadd.f32 %v1583, %v1726
    %v1728 = vpop.f32.mrf.mxu0
    %1729 = vdwg.mxu0
    %v1730 = vmax.f32 %v1668, 0.0
    %v1731 = vmax.f32 %v1671, 0.0
    %v1732 = vmax.f32 %v1676, 0.0
    %v1733 = vmax.f32 %v1679, 0.0
    %v1734 = vmax.f32 %v1684, 0.0
    %v1735 = vmax.f32 %v1687, 0.0
    %v1736 = vmax.f32 %v1692, 0.0
    %v1737 = vmax.f32 %v1695, 0.0
    %v1738 = vmax.f32 %v1700, 0.0
    %v1739 = vmax.f32 %v1703, 0.0
    %v1740 = vmax.f32 %v1708, 0.0
    %v1741 = vmax.f32 %v1711, 0.0
    %v1742 = vmax.f32 %v1716, 0.0
    %v1743 = vmax.f32 %v1719, 0.0
    %v1744 = vmax.f32 %v1724, 0.0
    %v1745 = vmax.f32 %v1727, 0.0
    %v1746 = vpack.c.bf16 %v1731, %v1730
    %v1747 = vpack.c.bf16 %v1733, %v1732
    %v1748 = vpack.c.bf16 %v1735, %v1734
    %v1749 = vpack.c.bf16 %v1737, %v1736
    %v1750 = vpack.c.bf16 %v1739, %v1738
    %v1751 = vpack.c.bf16 %v1741, %v1740
    %v1752 = vpack.c.bf16 %v1743, %v1742
    %v1753 = vpack.c.bf16 %v1745, %v1744
    %v1754 = vld [vmem:[#allocation10] sm:$0xf]
    %v1755 = vld [vmem:[#allocation10 + $0x4] sm:$0xf]
    %v1756 = vld [vmem:[#allocation10 + $0x8] sm:$0xf]
    %v1757 = vld [vmem:[#allocation10 + $0xc] sm:$0xf]
    %v1758 = vld [vmem:[#allocation10 + $0x10] sm:$0xf]
    %v1759 = vld [vmem:[#allocation10 + $0x14] sm:$0xf]
    %v1760 = vld [vmem:[#allocation10 + $0x18] sm:$0xf]
    %v1761 = vld [vmem:[#allocation10 + $0x1c] sm:$0xf]
    %v1762 = vld [vmem:[#allocation12] sm:$0x1]
    %v1764 = vlaneseq
    %v1765 = vshrl.u32 %v1764, 7
    %v1766 = vsub.s32 0, %v1765
    %v1767 = vrot.slane %v1762, %v1766
    %v1777 = vunpack.c.l.b16 %v1754
    %v1778 = vunpack.c.l.b16 %v1755
    %v1779 = vunpack.c.l.b16 %v1756
    %v1780 = vunpack.c.l.b16 %v1757
    %v1781 = vunpack.c.l.b16 %v1758
    %v1782 = vunpack.c.l.b16 %v1759
    %v1783 = vunpack.c.l.b16 %v1760
    %v1784 = vunpack.c.l.b16 %v1761
    %v1785 = vpack.c.b16 %v1778, %v1777
    %v1786 = vpack.c.b16 %v1780, %v1779
    %v1787 = vpack.c.b16 %v1782, %v1781
    %v1788 = vpack.c.b16 %v1784, %v1783
    %v1794 = vsel %vm1111, %v1746, 0
    %v1797 = vsel %vm1111, %v1747, 0
    %v1800 = vsel %vm1111, %v1748, 0
    %v1803 = vsel %vm1111, %v1749, 0
    %v1806 = vsel %vm1111, %v1750, 0
    %v1809 = vsel %vm1111, %v1751, 0
    %v1812 = vsel %vm1111, %v1752, 0
    %v1815 = vsel %vm1111, %v1753, 0
    %1817 = vmatprep.subr.bf16.mxu0 0
    %1818 = vmatpush1.bf16.msra.mxu0 0
    %1819 = vmatprep.subr.bf16.mxu0 0
    %1820 = vmatpush1.bf16.msra.mxu0 0
    %1821 = vmatprep.subr.bf16.mxu0 0
    %1822 = vmatpush1.bf16.msra.mxu0 0
    %1823 = vmatprep.subr.bf16.mxu0 0
    %1824 = vmatpush1.bf16.msra.mxu0 0
    %1825 = vmatprep.subr.bf16.mxu0 0
    %1826 = vmatpush1.bf16.msra.mxu0 %v1788
    %1827 = vmatprep.subr.bf16.mxu0 0
    %1828 = vmatpush1.bf16.msra.mxu0 %v1787
    %1829 = vmatprep.subr.bf16.mxu0 0
    %1830 = vmatpush1.bf16.msra.mxu0 %v1786
    %1831 = vmatprep.subr.bf16.mxu0 0
    %1832 = vmatpush1.bf16.msra.mxu0 %v1785
    %1833 = vmatprep.subr.bf16.mxu0 0
    %1834 = vmatpush2.bf16.msra.mxu0 0
    %1835 = vmatprep.subr.bf16.mxu0 0
    %1836 = vmatpush2.bf16.msra.mxu0 0
    %1837 = vmatprep.subr.bf16.mxu0 0
    %1838 = vmatpush2.bf16.msra.mxu0 0
    %1839 = vmatprep.subr.bf16.mxu0 0
    %1840 = vmatpush2.bf16.msra.mxu0 0
    %1841 = vmatprep.subr.bf16.mxu0 0
    %1842 = vmatpush2.bf16.msra.mxu0 0
    %1843 = vmatprep.subr.bf16.mxu0 0
    %1844 = vmatpush2.bf16.msra.mxu0 0
    %1845 = vmatprep.subr.bf16.mxu0 0
    %1846 = vmatpush2.bf16.msra.mxu0 0
    %1847 = vmatprep.subr.bf16.mxu0 0
    %1848 = vmatpush2.bf16.msra.mxu0 0
    %1849 = vmatprep.mubr.bf16.mxu0 0
    %1850 = vmatmul.mubr.bf16.gmra.mxu0 %v1794
    %v1851 = vpop.f32.mrf.mxu0
    %v1852 = vadd.f32 %v1767, %v1851
    %v1853 = vpop.f32.mrf.mxu0
    %v1854 = vpop.f32.mrf.mxu0
    %v1855 = vadd.f32 %v1767, %v1854
    %v1856 = vpop.f32.mrf.mxu0
    %1857 = vmatprep.mubr.bf16.mxu0 0
    %1858 = vmatmul.mubr.bf16.gmra.mxu0 %v1797
    %v1859 = vpop.f32.mrf.mxu0
    %v1860 = vadd.f32 %v1767, %v1859
    %v1861 = vpop.f32.mrf.mxu0
    %v1862 = vpop.f32.mrf.mxu0
    %v1863 = vadd.f32 %v1767, %v1862
    %v1864 = vpop.f32.mrf.mxu0
    %1865 = vmatprep.mubr.bf16.mxu0 0
    %1866 = vmatmul.mubr.bf16.gmra.mxu0 %v1800
    %v1867 = vpop.f32.mrf.mxu0
    %v1868 = vadd.f32 %v1767, %v1867
    %v1869 = vpop.f32.mrf.mxu0
    %v1870 = vpop.f32.mrf.mxu0
    %v1871 = vadd.f32 %v1767, %v1870
    %v1872 = vpop.f32.mrf.mxu0
    %1873 = vmatprep.mubr.bf16.mxu0 0
    %1874 = vmatmul.mubr.bf16.gmra.mxu0 %v1803
    %v1875 = vpop.f32.mrf.mxu0
    %v1876 = vadd.f32 %v1767, %v1875
    %v1877 = vpop.f32.mrf.mxu0
    %v1878 = vpop.f32.mrf.mxu0
    %v1879 = vadd.f32 %v1767, %v1878
    %v1880 = vpop.f32.mrf.mxu0
    %1881 = vmatprep.mubr.bf16.mxu0 0
    %1882 = vmatmul.mubr.bf16.gmra.mxu0 %v1806
    %v1883 = vpop.f32.mrf.mxu0
    %v1884 = vadd.f32 %v1767, %v1883
    %v1885 = vpop.f32.mrf.mxu0
    %v1886 = vpop.f32.mrf.mxu0
    %v1887 = vadd.f32 %v1767, %v1886
    %v1888 = vpop.f32.mrf.mxu0
    %1889 = vmatprep.mubr.bf16.mxu0 0
    %1890 = vmatmul.mubr.bf16.gmra.mxu0 %v1809
    %v1891 = vpop.f32.mrf.mxu0
    %v1892 = vadd.f32 %v1767, %v1891
    %v1893 = vpop.f32.mrf.mxu0
    %v1894 = vpop.f32.mrf.mxu0
    %v1895 = vadd.f32 %v1767, %v1894
    %v1896 = vpop.f32.mrf.mxu0
    %1897 = vmatprep.mubr.bf16.mxu0 0
    %1898 = vmatmul.mubr.bf16.gmra.mxu0 %v1812
    %v1899 = vpop.f32.mrf.mxu0
    %v1900 = vadd.f32 %v1767, %v1899
    %v1901 = vpop.f32.mrf.mxu0
    %v1902 = vpop.f32.mrf.mxu0
    %v1903 = vadd.f32 %v1767, %v1902
    %v1904 = vpop.f32.mrf.mxu0
    %1905 = vmatprep.mubr.bf16.mxu0 0
    %1906 = vmatmul.mubr.bf16.gmra.mxu0 %v1815
    %v1907 = vpop.f32.mrf.mxu0
    %v1908 = vadd.f32 %v1767, %v1907
    %v1909 = vpop.f32.mrf.mxu0
    %v1910 = vpop.f32.mrf.mxu0
    %v1911 = vadd.f32 %v1767, %v1910
    %v1912 = vpop.f32.mrf.mxu0
    %1913 = vdwg.mxu0
    %v1914 = vmax.f32 %v1852, 0.0
    %v1915 = vmax.f32 %v1855, 0.0
    %v1916 = vmax.f32 %v1860, 0.0
    %v1917 = vmax.f32 %v1863, 0.0
    %v1918 = vmax.f32 %v1868, 0.0
    %v1919 = vmax.f32 %v1871, 0.0
    %v1920 = vmax.f32 %v1876, 0.0
    %v1921 = vmax.f32 %v1879, 0.0
    %v1922 = vmax.f32 %v1884, 0.0
    %v1923 = vmax.f32 %v1887, 0.0
    %v1924 = vmax.f32 %v1892, 0.0
    %v1925 = vmax.f32 %v1895, 0.0
    %v1926 = vmax.f32 %v1900, 0.0
    %v1927 = vmax.f32 %v1903, 0.0
    %v1928 = vmax.f32 %v1908, 0.0
    %v1929 = vmax.f32 %v1911, 0.0
    %v1930 = vpack.c.bf16 %v1915, %v1914
    %v1931 = vpack.c.bf16 %v1917, %v1916
    %v1932 = vpack.c.bf16 %v1919, %v1918
    %v1933 = vpack.c.bf16 %v1921, %v1920
    %v1934 = vpack.c.bf16 %v1923, %v1922
    %v1935 = vpack.c.bf16 %v1925, %v1924
    %v1936 = vpack.c.bf16 %v1927, %v1926
    %v1937 = vpack.c.bf16 %v1929, %v1928
    %v1938 = vld [vmem:[#allocation13] sm:$0xff]
    %v1939 = vld [vmem:[#allocation13 + $0x8] sm:$0xff]
    %v1940 = vld [vmem:[#allocation13 + $0x10] sm:$0xff]
    %v1941 = vld [vmem:[#allocation13 + $0x18] sm:$0xff]
    %v1942 = vld [vmem:[#allocation13 + $0x20] sm:$0xff]
    %v1943 = vld [vmem:[#allocation13 + $0x28] sm:$0xff]
    %v1944 = vld [vmem:[#allocation13 + $0x30] sm:$0xff]
    %v1945 = vld [vmem:[#allocation13 + $0x38] sm:$0xff]
    %v1946 = vld [vmem:[#allocation13 + $0x40] sm:$0xff]
    %v1947 = vld [vmem:[#allocation13 + $0x48] sm:$0xff]
    %v1948 = vld [vmem:[#allocation13 + $0x50] sm:$0xff]
    %v1949 = vld [vmem:[#allocation13 + $0x58] sm:$0xff]
    %v1950 = vld [vmem:[#allocation13 + $0x60] sm:$0xff]
    %v1951 = vld [vmem:[#allocation13 + $0x68] sm:$0xff]
    %v1952 = vld [vmem:[#allocation13 + $0x70] sm:$0xff]
    %v1953 = vld [vmem:[#allocation13 + $0x78] sm:$0xff]
    %v1954 = vld [vmem:[%s17] sm:$0x3]
    %v1956 = vlaneseq
    %v1957 = vshrl.u32 %v1956, 7
    %v1958 = vsub.s32 0, %v1957
    %v1959 = vrot.slane %v1954, %v1958
    %v1960 = vlaneseq
    %v1961 = vshrl.u32 %v1960, 7
    %v1962 = vsub.s32 1, %v1961
    %v1963 = vrot.slane %v1954, %v1962
    %v1982 = vunpack.c.l.b16 %v1938
    %v1983 = vunpack.c.h.b16 %v1938
    %v1984 = vunpack.c.l.b16 %v1939
    %v1985 = vunpack.c.h.b16 %v1939
    %v1986 = vunpack.c.l.b16 %v1940
    %v1987 = vunpack.c.h.b16 %v1940
    %v1988 = vunpack.c.l.b16 %v1941
    %v1989 = vunpack.c.h.b16 %v1941
    %v1990 = vunpack.c.l.b16 %v1942
    %v1991 = vunpack.c.h.b16 %v1942
    %v1992 = vunpack.c.l.b16 %v1943
    %v1993 = vunpack.c.h.b16 %v1943
    %v1994 = vunpack.c.l.b16 %v1944
    %v1995 = vunpack.c.h.b16 %v1944
    %v1996 = vunpack.c.l.b16 %v1945
    %v1997 = vunpack.c.h.b16 %v1945
    %v1998 = vunpack.c.l.b16 %v1946
    %v1999 = vunpack.c.h.b16 %v1946
    %v2000 = vunpack.c.l.b16 %v1947
    %v2001 = vunpack.c.h.b16 %v1947
    %v2002 = vunpack.c.l.b16 %v1948
    %v2003 = vunpack.c.h.b16 %v1948
    %v2004 = vunpack.c.l.b16 %v1949
    %v2005 = vunpack.c.h.b16 %v1949
    %v2006 = vunpack.c.l.b16 %v1950
    %v2007 = vunpack.c.h.b16 %v1950
    %v2008 = vunpack.c.l.b16 %v1951
    %v2009 = vunpack.c.h.b16 %v1951
    %v2010 = vunpack.c.l.b16 %v1952
    %v2011 = vunpack.c.h.b16 %v1952
    %v2012 = vunpack.c.l.b16 %v1953
    %v2013 = vunpack.c.h.b16 %v1953
    %v2014 = vpack.c.b16 %v1984, %v1982
    %v2015 = vpack.c.b16 %v1985, %v1983
    %v2016 = vpack.c.b16 %v1988, %v1986
    %v2017 = vpack.c.b16 %v1989, %v1987
    %v2018 = vpack.c.b16 %v1992, %v1990
    %v2019 = vpack.c.b16 %v1993, %v1991
    %v2020 = vpack.c.b16 %v1996, %v1994
    %v2021 = vpack.c.b16 %v1997, %v1995
    %v2022 = vpack.c.b16 %v2000, %v1998
    %v2023 = vpack.c.b16 %v2001, %v1999
    %v2024 = vpack.c.b16 %v2004, %v2002
    %v2025 = vpack.c.b16 %v2005, %v2003
    %v2026 = vpack.c.b16 %v2008, %v2006
    %v2027 = vpack.c.b16 %v2009, %v2007
    %v2028 = vpack.c.b16 %v2012, %v2010
    %v2029 = vpack.c.b16 %v2013, %v2011
    %2046 = vmatprep.subr.bf16.mxu0 %v2029
    %2047 = vmatpush1.bf16.msra.mxu0 %v2028
    %2048 = vmatprep.subr.bf16.mxu0 %v2027
    %2049 = vmatpush1.bf16.msra.mxu0 %v2026
    %2050 = vmatprep.subr.bf16.mxu0 %v2025
    %2051 = vmatpush1.bf16.msra.mxu0 %v2024
    %2052 = vmatprep.subr.bf16.mxu0 %v2023
    %2053 = vmatpush1.bf16.msra.mxu0 %v2022
    %2054 = vmatprep.subr.bf16.mxu0 %v2021
    %2055 = vmatpush1.bf16.msra.mxu0 %v2020
    %2056 = vmatprep.subr.bf16.mxu0 %v2019
    %2057 = vmatpush1.bf16.msra.mxu0 %v2018
    %2058 = vmatprep.subr.bf16.mxu0 %v2017
    %2059 = vmatpush1.bf16.msra.mxu0 %v2016
    %2060 = vmatprep.subr.bf16.mxu0 %v2015
    %2061 = vmatpush1.bf16.msra.mxu0 %v2014
    %2062 = vmatprep.subr.bf16.mxu0 0
    %2063 = vmatpush2.bf16.msra.mxu0 0
    %2064 = vmatprep.subr.bf16.mxu0 0
    %2065 = vmatpush2.bf16.msra.mxu0 0
    %2066 = vmatprep.subr.bf16.mxu0 0
    %2067 = vmatpush2.bf16.msra.mxu0 0
    %2068 = vmatprep.subr.bf16.mxu0 0
    %2069 = vmatpush2.bf16.msra.mxu0 0
    %2070 = vmatprep.subr.bf16.mxu0 0
    %2071 = vmatpush2.bf16.msra.mxu0 0
    %2072 = vmatprep.subr.bf16.mxu0 0
    %2073 = vmatpush2.bf16.msra.mxu0 0
    %2074 = vmatprep.subr.bf16.mxu0 0
    %2075 = vmatpush2.bf16.msra.mxu0 0
    %2076 = vmatprep.subr.bf16.mxu0 0
    %2077 = vmatpush2.bf16.msra.mxu0 0
    %2078 = vmatprep.mubr.bf16.mxu0 0
    %2079 = vmatmul.mubr.bf16.gmra.mxu0 %v1930
    %v2080 = vpop.f32.mrf.mxu0
    %v2081 = vadd.f32 %v1959, %v2080
    %v2082 = vpop.f32.mrf.mxu0
    %v2083 = vadd.f32 %v1963, %v2082
    %v2084 = vpop.f32.mrf.mxu0
    %v2085 = vadd.f32 %v1959, %v2084
    %v2086 = vpop.f32.mrf.mxu0
    %v2087 = vadd.f32 %v1963, %v2086
    %2088 = vmatprep.mubr.bf16.mxu0 0
    %2089 = vmatmul.mubr.bf16.gmra.mxu0 %v1931
    %v2090 = vpop.f32.mrf.mxu0
    %v2091 = vadd.f32 %v1959, %v2090
    %v2092 = vpop.f32.mrf.mxu0
    %v2093 = vadd.f32 %v1963, %v2092
    %v2094 = vpop.f32.mrf.mxu0
    %v2095 = vadd.f32 %v1959, %v2094
    %v2096 = vpop.f32.mrf.mxu0
    %v2097 = vadd.f32 %v1963, %v2096
    %2098 = vmatprep.mubr.bf16.mxu0 0
    %2099 = vmatmul.mubr.bf16.gmra.mxu0 %v1932
    %v2100 = vpop.f32.mrf.mxu0
    %v2101 = vadd.f32 %v1959, %v2100
    %v2102 = vpop.f32.mrf.mxu0
    %v2103 = vadd.f32 %v1963, %v2102
    %v2104 = vpop.f32.mrf.mxu0
    %v2105 = vadd.f32 %v1959, %v2104
    %v2106 = vpop.f32.mrf.mxu0
    %v2107 = vadd.f32 %v1963, %v2106
    %2108 = vmatprep.mubr.bf16.mxu0 0
    %2109 = vmatmul.mubr.bf16.gmra.mxu0 %v1933
    %v2110 = vpop.f32.mrf.mxu0
    %v2111 = vadd.f32 %v1959, %v2110
    %v2112 = vpop.f32.mrf.mxu0
    %v2113 = vadd.f32 %v1963, %v2112
    %v2114 = vpop.f32.mrf.mxu0
    %v2115 = vadd.f32 %v1959, %v2114
    %v2116 = vpop.f32.mrf.mxu0
    %v2117 = vadd.f32 %v1963, %v2116
    %2118 = vmatprep.mubr.bf16.mxu0 0
    %2119 = vmatmul.mubr.bf16.gmra.mxu0 %v1934
    %v2120 = vpop.f32.mrf.mxu0
    %v2121 = vadd.f32 %v1959, %v2120
    %v2122 = vpop.f32.mrf.mxu0
    %v2123 = vadd.f32 %v1963, %v2122
    %v2124 = vpop.f32.mrf.mxu0
    %v2125 = vadd.f32 %v1959, %v2124
    %v2126 = vpop.f32.mrf.mxu0
    %v2127 = vadd.f32 %v1963, %v2126
    %2128 = vmatprep.mubr.bf16.mxu0 0
    %2129 = vmatmul.mubr.bf16.gmra.mxu0 %v1935
    %v2130 = vpop.f32.mrf.mxu0
    %v2131 = vadd.f32 %v1959, %v2130
    %v2132 = vpop.f32.mrf.mxu0
    %v2133 = vadd.f32 %v1963, %v2132
    %v2134 = vpop.f32.mrf.mxu0
    %v2135 = vadd.f32 %v1959, %v2134
    %v2136 = vpop.f32.mrf.mxu0
    %v2137 = vadd.f32 %v1963, %v2136
    %2138 = vmatprep.mubr.bf16.mxu0 0
    %2139 = vmatmul.mubr.bf16.gmra.mxu0 %v1936
    %v2140 = vpop.f32.mrf.mxu0
    %v2141 = vadd.f32 %v1959, %v2140
    %v2142 = vpop.f32.mrf.mxu0
    %v2143 = vadd.f32 %v1963, %v2142
    %v2144 = vpop.f32.mrf.mxu0
    %v2145 = vadd.f32 %v1959, %v2144
    %v2146 = vpop.f32.mrf.mxu0
    %v2147 = vadd.f32 %v1963, %v2146
    %2148 = vmatprep.mubr.bf16.mxu0 0
    %2149 = vmatmul.mubr.bf16.gmra.mxu0 %v1937
    %v2150 = vpop.f32.mrf.mxu0
    %v2151 = vadd.f32 %v1959, %v2150
    %v2152 = vpop.f32.mrf.mxu0
    %v2153 = vadd.f32 %v1963, %v2152
    %v2154 = vpop.f32.mrf.mxu0
    %v2155 = vadd.f32 %v1959, %v2154
    %v2156 = vpop.f32.mrf.mxu0
    %v2157 = vadd.f32 %v1963, %v2156
    %2158 = vdwg.mxu0
    %v2159 = vsub.f32 0.0, %v2081
    %v2160 = vsub.f32 0.0, %v2083
    %v2161 = vsub.f32 0.0, %v2085
    %v2162 = vsub.f32 0.0, %v2087
    %v2163 = vsub.f32 0.0, %v2091
    %v2164 = vsub.f32 0.0, %v2093
    %v2165 = vsub.f32 0.0, %v2095
    %v2166 = vsub.f32 0.0, %v2097
    %v2167 = vsub.f32 0.0, %v2101
    %v2168 = vsub.f32 0.0, %v2103
    %v2169 = vsub.f32 0.0, %v2105
    %v2170 = vsub.f32 0.0, %v2107
    %v2171 = vsub.f32 0.0, %v2111
    %v2172 = vsub.f32 0.0, %v2113
    %v2173 = vsub.f32 0.0, %v2115
    %v2174 = vsub.f32 0.0, %v2117
    %v2175 = vsub.f32 0.0, %v2121
    %v2176 = vsub.f32 0.0, %v2123
    %v2177 = vsub.f32 0.0, %v2125
    %v2178 = vsub.f32 0.0, %v2127
    %v2179 = vsub.f32 0.0, %v2131
    %v2180 = vsub.f32 0.0, %v2133
    %v2181 = vsub.f32 0.0, %v2135
    %v2182 = vsub.f32 0.0, %v2137
    %v2183 = vsub.f32 0.0, %v2141
    %v2184 = vsub.f32 0.0, %v2143
    %v2185 = vsub.f32 0.0, %v2145
    %v2186 = vsub.f32 0.0, %v2147
    %v2187 = vsub.f32 0.0, %v2151
    %v2188 = vsub.f32 0.0, %v2153
    %v2189 = vsub.f32 0.0, %v2155
    %v2190 = vsub.f32 0.0, %v2157
    %v2191 = vmul.f32 %v2159, 1.442695
    %v2192 = vpow.pop %v2191
    %v2193 = vmul.f32 %v2160, 1.442695
    %v2194 = vpow.pop %v2193
    %v2195 = vmul.f32 %v2161, 1.442695
    %v2196 = vpow.pop %v2195
    %v2197 = vmul.f32 %v2162, 1.442695
    %v2198 = vpow.pop %v2197
    %v2199 = vmul.f32 %v2163, 1.442695
    %v2200 = vpow.pop %v2199
    %v2201 = vmul.f32 %v2164, 1.442695
    %v2202 = vpow.pop %v2201
    %v2203 = vmul.f32 %v2165, 1.442695
    %v2204 = vpow.pop %v2203
    %v2205 = vmul.f32 %v2166, 1.442695
    %v2206 = vpow.pop %v2205
    %v2207 = vmul.f32 %v2167, 1.442695
    %v2208 = vpow.pop %v2207
    %v2209 = vmul.f32 %v2168, 1.442695
    %v2210 = vpow.pop %v2209
    %v2211 = vmul.f32 %v2169, 1.442695
    %v2212 = vpow.pop %v2211
    %v2213 = vmul.f32 %v2170, 1.442695
    %v2214 = vpow.pop %v2213
    %v2215 = vmul.f32 %v2171, 1.442695
    %v2216 = vpow.pop %v2215
    %v2217 = vmul.f32 %v2172, 1.442695
    %v2218 = vpow.pop %v2217
    %v2219 = vmul.f32 %v2173, 1.442695
    %v2220 = vpow.pop %v2219
    %v2221 = vmul.f32 %v2174, 1.442695
    %v2222 = vpow.pop %v2221
    %v2223 = vmul.f32 %v2175, 1.442695
    %v2224 = vpow.pop %v2223
    %v2225 = vmul.f32 %v2176, 1.442695
    %v2226 = vpow.pop %v2225
    %v2227 = vmul.f32 %v2177, 1.442695
    %v2228 = vpow.pop %v2227
    %v2229 = vmul.f32 %v2178, 1.442695
    %v2230 = vpow.pop %v2229
    %v2231 = vmul.f32 %v2179, 1.442695
    %v2232 = vpow.pop %v2231
    %v2233 = vmul.f32 %v2180, 1.442695
    %v2234 = vpow.pop %v2233
    %v2235 = vmul.f32 %v2181, 1.442695
    %v2236 = vpow.pop %v2235
    %v2237 = vmul.f32 %v2182, 1.442695
    %v2238 = vpow.pop %v2237
    %v2239 = vmul.f32 %v2183, 1.442695
    %v2240 = vpow.pop %v2239
    %v2241 = vmul.f32 %v2184, 1.442695
    %v2242 = vpow.pop %v2241
    %v2243 = vmul.f32 %v2185, 1.442695
    %v2244 = vpow.pop %v2243
    %v2245 = vmul.f32 %v2186, 1.442695
    %v2246 = vpow.pop %v2245
    %v2247 = vmul.f32 %v2187, 1.442695
    %v2248 = vpow.pop %v2247
    %v2249 = vmul.f32 %v2188, 1.442695
    %v2250 = vpow.pop %v2249
    %v2251 = vmul.f32 %v2189, 1.442695
    %v2252 = vpow.pop %v2251
    %v2253 = vmul.f32 %v2190, 1.442695
    %v2254 = vpow.pop %v2253
    %v2255 = vadd.f32 %v2192, 1.0
    %v2256 = vadd.f32 %v2194, 1.0
    %v2257 = vadd.f32 %v2196, 1.0
    %v2258 = vadd.f32 %v2198, 1.0
    %v2259 = vadd.f32 %v2200, 1.0
    %v2260 = vadd.f32 %v2202, 1.0
    %v2261 = vadd.f32 %v2204, 1.0
    %v2262 = vadd.f32 %v2206, 1.0
    %v2263 = vadd.f32 %v2208, 1.0
    %v2264 = vadd.f32 %v2210, 1.0
    %v2265 = vadd.f32 %v2212, 1.0
    %v2266 = vadd.f32 %v2214, 1.0
    %v2267 = vadd.f32 %v2216, 1.0
    %v2268 = vadd.f32 %v2218, 1.0
    %v2269 = vadd.f32 %v2220, 1.0
    %v2270 = vadd.f32 %v2222, 1.0
    %v2271 = vadd.f32 %v2224, 1.0
    %v2272 = vadd.f32 %v2226, 1.0
    %v2273 = vadd.f32 %v2228, 1.0
    %v2274 = vadd.f32 %v2230, 1.0
    %v2275 = vadd.f32 %v2232, 1.0
    %v2276 = vadd.f32 %v2234, 1.0
    %v2277 = vadd.f32 %v2236, 1.0
    %v2278 = vadd.f32 %v2238, 1.0
    %v2279 = vadd.f32 %v2240, 1.0
    %v2280 = vadd.f32 %v2242, 1.0
    %v2281 = vadd.f32 %v2244, 1.0
    %v2282 = vadd.f32 %v2246, 1.0
    %v2283 = vadd.f32 %v2248, 1.0
    %v2284 = vadd.f32 %v2250, 1.0
    %v2285 = vadd.f32 %v2252, 1.0
    %v2286 = vadd.f32 %v2254, 1.0
    %v2287 = vrcp.pop %v2255
    %v2288 = vrcp.pop %v2256
    %v2289 = vrcp.pop %v2257
    %v2290 = vrcp.pop %v2258
    %v2291 = vrcp.pop %v2259
    %v2292 = vrcp.pop %v2260
    %v2293 = vrcp.pop %v2261
    %v2294 = vrcp.pop %v2262
    %v2295 = vrcp.pop %v2263
    %v2296 = vrcp.pop %v2264
    %v2297 = vrcp.pop %v2265
    %v2298 = vrcp.pop %v2266
    %v2299 = vrcp.pop %v2267
    %v2300 = vrcp.pop %v2268
    %v2301 = vrcp.pop %v2269
    %v2302 = vrcp.pop %v2270
    %v2303 = vrcp.pop %v2271
    %v2304 = vrcp.pop %v2272
    %v2305 = vrcp.pop %v2273
    %v2306 = vrcp.pop %v2274
    %v2307 = vrcp.pop %v2275
    %v2308 = vrcp.pop %v2276
    %v2309 = vrcp.pop %v2277
    %v2310 = vrcp.pop %v2278
    %v2311 = vrcp.pop %v2279
    %v2312 = vrcp.pop %v2280
    %v2313 = vrcp.pop %v2281
    %v2314 = vrcp.pop %v2282
    %v2315 = vrcp.pop %v2283
    %v2316 = vrcp.pop %v2284
    %v2317 = vrcp.pop %v2285
    %v2318 = vrcp.pop %v2286
    %v2319 = vmax.f32 %v2287, 0.0
    %v2320 = vmax.f32 %v2288, 0.0
    %v2321 = vmax.f32 %v2289, 0.0
    %v2322 = vmax.f32 %v2290, 0.0
    %v2323 = vmax.f32 %v2291, 0.0
    %v2324 = vmax.f32 %v2292, 0.0
    %v2325 = vmax.f32 %v2293, 0.0
    %v2326 = vmax.f32 %v2294, 0.0
    %v2327 = vmax.f32 %v2295, 0.0
    %v2328 = vmax.f32 %v2296, 0.0
    %v2329 = vmax.f32 %v2297, 0.0
    %v2330 = vmax.f32 %v2298, 0.0
    %v2331 = vmax.f32 %v2299, 0.0
    %v2332 = vmax.f32 %v2300, 0.0
    %v2333 = vmax.f32 %v2301, 0.0
    %v2334 = vmax.f32 %v2302, 0.0
    %v2335 = vmax.f32 %v2303, 0.0
    %v2336 = vmax.f32 %v2304, 0.0
    %v2337 = vmax.f32 %v2305, 0.0
    %v2338 = vmax.f32 %v2306, 0.0
    %v2339 = vmax.f32 %v2307, 0.0
    %v2340 = vmax.f32 %v2308, 0.0
    %v2341 = vmax.f32 %v2309, 0.0
    %v2342 = vmax.f32 %v2310, 0.0
    %v2343 = vmax.f32 %v2311, 0.0
    %v2344 = vmax.f32 %v2312, 0.0
    %v2345 = vmax.f32 %v2313, 0.0
    %v2346 = vmax.f32 %v2314, 0.0
    %v2347 = vmax.f32 %v2315, 0.0
    %v2348 = vmax.f32 %v2316, 0.0
    %v2349 = vmax.f32 %v2317, 0.0
    %v2350 = vmax.f32 %v2318, 0.0
    %v2351 = vmin.f32 %v2319, 1.0
    %v2352 = vmin.f32 %v2320, 1.0
    %v2353 = vmin.f32 %v2321, 1.0
    %v2354 = vmin.f32 %v2322, 1.0
    %v2355 = vmin.f32 %v2323, 1.0
    %v2356 = vmin.f32 %v2324, 1.0
    %v2357 = vmin.f32 %v2325, 1.0
    %v2358 = vmin.f32 %v2326, 1.0
    %v2359 = vmin.f32 %v2327, 1.0
    %v2360 = vmin.f32 %v2328, 1.0
    %v2361 = vmin.f32 %v2329, 1.0
    %v2362 = vmin.f32 %v2330, 1.0
    %v2363 = vmin.f32 %v2331, 1.0
    %v2364 = vmin.f32 %v2332, 1.0
    %v2365 = vmin.f32 %v2333, 1.0
    %v2366 = vmin.f32 %v2334, 1.0
    %v2367 = vmin.f32 %v2335, 1.0
    %v2368 = vmin.f32 %v2336, 1.0
    %v2369 = vmin.f32 %v2337, 1.0
    %v2370 = vmin.f32 %v2338, 1.0
    %v2371 = vmin.f32 %v2339, 1.0
    %v2372 = vmin.f32 %v2340, 1.0
    %v2373 = vmin.f32 %v2341, 1.0
    %v2374 = vmin.f32 %v2342, 1.0
    %v2375 = vmin.f32 %v2343, 1.0
    %v2376 = vmin.f32 %v2344, 1.0
    %v2377 = vmin.f32 %v2345, 1.0
    %v2378 = vmin.f32 %v2346, 1.0
    %v2379 = vmin.f32 %v2347, 1.0
    %v2380 = vmin.f32 %v2348, 1.0
    %v2381 = vmin.f32 %v2349, 1.0
    %v2382 = vmin.f32 %v2350, 1.0
    %2383 = vst [vmem:[%s18] sm:$0xff] %v2351
    %2384 = vst [vmem:[%s18 + $0x8] sm:$0xff] %v2352
    %2385 = vst [vmem:[%s18 + $0x10] sm:$0xff] %v2353
    %2386 = vst [vmem:[%s18 + $0x18] sm:$0xff] %v2354
    %2387 = vst [vmem:[%s18 + $0x20] sm:$0xff] %v2355
    %2388 = vst [vmem:[%s18 + $0x28] sm:$0xff] %v2356
    %2389 = vst [vmem:[%s18 + $0x30] sm:$0xff] %v2357
    %2390 = vst [vmem:[%s18 + $0x38] sm:$0xff] %v2358
    %2391 = vst [vmem:[%s18 + $0x40] sm:$0xff] %v2359
    %2392 = vst [vmem:[%s18 + $0x48] sm:$0xff] %v2360
    %2393 = vst [vmem:[%s18 + $0x50] sm:$0xff] %v2361
    %2394 = vst [vmem:[%s18 + $0x58] sm:$0xff] %v2362
    %2395 = vst [vmem:[%s18 + $0x60] sm:$0xff] %v2363
    %2396 = vst [vmem:[%s18 + $0x68] sm:$0xff] %v2364
    %2397 = vst [vmem:[%s18 + $0x70] sm:$0xff] %v2365
    %2398 = vst [vmem:[%s18 + $0x78] sm:$0xff] %v2366
    %2399 = vst [vmem:[%s18 + $0x80] sm:$0xff] %v2367
    %2400 = vst [vmem:[%s18 + $0x88] sm:$0xff] %v2368
    %2401 = vst [vmem:[%s18 + $0x90] sm:$0xff] %v2369
    %2402 = vst [vmem:[%s18 + $0x98] sm:$0xff] %v2370
    %2403 = vst [vmem:[%s18 + $0xa0] sm:$0xff] %v2371
    %2404 = vst [vmem:[%s18 + $0xa8] sm:$0xff] %v2372
    %2405 = vst [vmem:[%s18 + $0xb0] sm:$0xff] %v2373
    %2406 = vst [vmem:[%s18 + $0xb8] sm:$0xff] %v2374
    %2407 = vst [vmem:[%s18 + $0xc0] sm:$0xff] %v2375
    %2408 = vst [vmem:[%s18 + $0xc8] sm:$0xff] %v2376
    %2409 = vst [vmem:[%s18 + $0xd0] sm:$0xff] %v2377
    %2410 = vst [vmem:[%s18 + $0xd8] sm:$0xff] %v2378
    %2411 = vst [vmem:[%s18 + $0xe0] sm:$0xff] %v2379
    %2412 = vst [vmem:[%s18 + $0xe8] sm:$0xff] %v2380
    %2413 = vst [vmem:[%s18 + $0xf0] sm:$0xff] %v2381
    %2414 = vst [vmem:[%s18 + $0xf8] sm:$0xff] %v2382
    // Predicated region
    $region106: #{vae_forward.1} parent=1 // pred_check
      _
    $region107: #{vae_forward.1} parent=1 // pred_check_branch
      %2416 = sbr.rel (0) target = $region109
    $region108: #{vae_forward.1} parent=1 // pred_region
      _
    $region109: #{vae_forward.1} parent=1 // pred_fallthru
      _
    // Predicated region
    $region110: #{vae_forward.1} parent=1 // pred_check
      _
    $region111: #{vae_forward.1} parent=1 // pred_check_branch
      %2418 = sbr.rel (0) target = $region113
    $region112: #{vae_forward.1} parent=1 // pred_region
      _
    $region113: #{vae_forward.1} parent=1 // pred_fallthru
      _
    // Predicated region
    $region114: #{vae_forward.1} parent=1 // pred_check
      _
    $region115: #{vae_forward.1} parent=1 // pred_check_branch
      %2420 = sbr.rel (0) target = $region117
    $region116: #{vae_forward.1} parent=1 // pred_region
      _
    $region117: #{vae_forward.1} parent=1 // pred_fallthru
      _
    // Predicated region
    $region118: #{vae_forward.1} parent=1 // pred_check
      _
    $region119: #{vae_forward.1} parent=1 // pred_check_branch
      %2422 = sbr.rel (0) target = $region121
    $region120: #{vae_forward.1} parent=1 // pred_region
      _
    $region121: #{vae_forward.1} parent=1 // pred_fallthru
      _
    %2423 = vsyncpa [#allocation3], 1
    %2424 = vsyncpa [#allocation5], 1
    %2425 = vsyncpa [#allocation8], 1
    %2426 = vsyncpa [#allocation11], 1
    %2427 = vsyncpa [#allocation14], 1

</llo_original>
